<compile_context>
chip_gen: v7x
topology: tpu7x:2x2x1
jax: 0.10.0
libtpu: 0.0.40
codegen_flags: <defaults>
</compile_context>

<pallas_src>
import jax
import jax.numpy as jnp
from jax.experimental import pallas as pl
from jax.experimental.pallas import tpu as pltpu

KDIM = 512
POS_DIM = 10
POS_PAD = 16  # pos_emb(10) + bias ones-column(1) + zero pad(5) -> aligned to 16 sublanes


def updater_kernel(x12_ref, posb_ref, w12_ref, w3b_ref, out_ref):
    # Fused "concat -> Linear -> ReLU":
    #   x12  = [latent_vec | feat]                         (B, 1024)  f32
    #   posb = [pos_emb | 1 | 0...]                        (B, 16)    f32
    #   w12  = W.T rows    0..1023                         (1024, TN) bf16
    #   w3b  = [W.T rows 1024..1033 ; bias ; zeros]        (16,   TN) bf16
    # bf16 weights are upcast in-register; accumulation is exact f32.
    acc = jnp.dot(x12_ref[...], w12_ref[...].astype(jnp.float32),
                  preferred_element_type=jnp.float32)
    acc = acc + jnp.dot(posb_ref[...], w3b_ref[...].astype(jnp.float32),
                        preferred_element_type=jnp.float32)
    out_ref[...] = jnp.maximum(acc, 0.0).astype(out_ref.dtype)


def updater_forward(latent_vec, feat, pos_emb, w12, w3b, *, n_col_tiles=1):
    """n_col_tiles=1: single-step grid (best on v5e/v6e, 1 TC).
    n_col_tiles=2: two parallel column tiles so v7x's 2 TensorCores each
    stream half of the weights."""
    B = latent_vec.shape[0]
    assert KDIM % n_col_tiles == 0
    tn = KDIM // n_col_tiles

    # Fold the three activations into two operands (tiny XLA copies, ~36 KB):
    # one long-K (1024) operand and one padded (16) operand carrying the bias.
    x12 = jnp.concatenate([latent_vec, feat], axis=-1)
    posb = jnp.concatenate(
        [pos_emb,
         jnp.ones((B, 1), latent_vec.dtype),
         jnp.zeros((B, POS_PAD - POS_DIM - 1), latent_vec.dtype)],
        axis=-1)

    # NOTE: if this op sits inside a step loop with static weights, hoist the
    # bf16 weight arrays out of the loop so the ~1 MB stream is paid once.
    return pl.pallas_call(
        updater_kernel,
        out_shape=jax.ShapeDtypeStruct((B, KDIM), latent_vec.dtype),
        grid_spec=pltpu.PrefetchScalarGridSpec(
            num_scalar_prefetch=0,
            grid=(n_col_tiles,),
            in_specs=[
                pl.BlockSpec((B, 2 * KDIM), lambda j: (0, 0)),    # [lv|feat]
                pl.BlockSpec((B, POS_PAD), lambda j: (0, 0)),     # [pos|1|0]
                pl.BlockSpec((2 * KDIM, tn), lambda j: (0, j)),   # W12 cols
                pl.BlockSpec((POS_PAD, tn), lambda j: (0, j)),    # W3+bias cols
            ],
            out_specs=pl.BlockSpec((B, tn), lambda j: (0, j)),
        ),
        compiler_params=pltpu.CompilerParams(
            dimension_semantics=("parallel",)),
    )(x12, posb, w12, w3b)


def init_params(key):
    """Deterministic init mimicking nn.Linear default (uniform +-1/sqrt(fan_in)).

    Returns bf16 weight blocks:
      w12 : (1024, 512)  == W.T rows for [latent_vec | feat]
      w3b : (16, 512)    == rows 0..9 = W.T rows for pos_emb, row 10 = bias,
                            rows 11..15 = 0 (sublane padding).
    """
    fan_in = 2 * KDIM + POS_DIM
    bound = 1.0 / jnp.sqrt(jnp.float32(fan_in))
    kw, kb = jax.random.split(key)
    w_full = jax.random.uniform(kw, (KDIM, fan_in), jnp.float32, -bound, bound)
    bias = jax.random.uniform(kb, (KDIM,), jnp.float32, -bound, bound)
    w_t = w_full.T                                # (1034, 512): y = x @ w_t + b
    w12 = w_t[:2 * KDIM, :].astype(jnp.bfloat16)  # (1024, 512)
    w3b = jnp.zeros((POS_PAD, KDIM), jnp.float32)
    w3b = w3b.at[:POS_DIM, :].set(w_t[2 * KDIM:, :])
    w3b = w3b.at[POS_DIM, :].set(bias)
    return w12, w3b.astype(jnp.bfloat16)


if __name__ == "__main__":
    key = jax.random.PRNGKey(0)
    kp, k1, k2, k3 = jax.random.split(key, 4)

    B = 8  # small batch; hidden size 512 is fixed by the module
    latent_vec = jax.random.normal(k1, (B, KDIM), jnp.float32)
    feat = jax.random.normal(k2, (B, KDIM), jnp.float32)
    pos_emb = jax.random.normal(k3, (B, POS_DIM), jnp.float32)

    w12, w3b = init_params(kp)

    out = updater_forward(latent_vec, feat, pos_emb, w12, w3b)
    out = jax.block_until_ready(out)

    # Reference: plain-JAX forward of the PyTorch module using the same
    # bf16-rounded weight values (upcast to f32, exactly as the kernel does).
    comb = jnp.concatenate([latent_vec, feat, pos_emb], axis=-1)
    w_t_full = jnp.concatenate(
        [w12.astype(jnp.float32), w3b[:POS_DIM].astype(jnp.float32)], axis=0)
    bias_ref = w3b[POS_DIM].astype(jnp.float32)
    ref = jnp.maximum(comb @ w_t_full + bias_ref, 0.0)

    assert out.shape == (B, KDIM)
    assert jnp.allclose(out, ref, atol=1e-3, rtol=1e-3)

    print("KERNEL_OK")
</pallas_src>

<mosaic_0001>
module attributes {stable_mosaic.version = 11 : i64} {
  func.func @updater_kernel(%arg0: i32, %arg1: memref<8x1024xf32, #tpu.memory_space<vmem>>, %arg2: memref<8x16xf32, #tpu.memory_space<vmem>>, %arg3: memref<1024x512xbf16, #tpu.memory_space<vmem>>, %arg4: memref<16x512xbf16, #tpu.memory_space<vmem>>, %arg5: memref<8x512xf32, #tpu.memory_space<vmem>>) attributes {dimension_semantics = [#tpu.dimension_semantics<parallel>], iteration_bounds = array<i64: 1>, scalar_prefetch = 0 : i64, scratch_operands = 0 : i64, tpu.core_type = #tpu.core_type<tc>, window_params = [{pipeline_mode = #tpu.pipeline_mode<synchronous>, transform_indices = @transform_0, window_bounds = array<i64: 8, 1024>}, {pipeline_mode = #tpu.pipeline_mode<synchronous>, transform_indices = @transform_1, window_bounds = array<i64: 8, 16>}, {transform_indices = @transform_2, window_bounds = array<i64: 1024, 512>}, {transform_indices = @transform_3, window_bounds = array<i64: 16, 512>}, {transform_indices = @transform_4, window_bounds = array<i64: 8, 512>}]} {
    %c0 = arith.constant 0 : index
    %c0_0 = arith.constant 0 : index
    %0 = vector.load %arg1[%c0, %c0_0] : memref<8x1024xf32, #tpu.memory_space<vmem>>, vector<8x1024xf32>
    %c0_1 = arith.constant 0 : index
    %c0_2 = arith.constant 0 : index
    %1 = vector.load %arg3[%c0_1, %c0_2] : memref<1024x512xbf16, #tpu.memory_space<vmem>>, vector<1024x512xbf16>
    %2 = arith.extf %1 : vector<1024x512xbf16> to vector<1024x512xf32>
    %cst = arith.constant dense<0.000000e+00> : vector<8x512xf32>
    %3 = tpu.matmul %0, %2, %cst {dimension_numbers = #tpu.dot_dimension_numbers<[1], [0], [0], [1], [0, 0, 1, 1], [], []>} : vector<8x1024xf32>, vector<1024x512xf32>, vector<8x512xf32> -> vector<8x512xf32>
    %c0_3 = arith.constant 0 : index
    %c0_4 = arith.constant 0 : index
    %4 = vector.load %arg2[%c0_3, %c0_4] : memref<8x16xf32, #tpu.memory_space<vmem>>, vector<8x16xf32>
    %c0_5 = arith.constant 0 : index
    %c0_6 = arith.constant 0 : index
    %5 = vector.load %arg4[%c0_5, %c0_6] : memref<16x512xbf16, #tpu.memory_space<vmem>>, vector<16x512xbf16>
    %6 = arith.extf %5 : vector<16x512xbf16> to vector<16x512xf32>
    %cst_7 = arith.constant dense<0.000000e+00> : vector<8x512xf32>
    %7 = tpu.matmul %4, %6, %cst_7 {dimension_numbers = #tpu.dot_dimension_numbers<[1], [0], [0], [1], [0, 0, 1, 1], [], []>} : vector<8x16xf32>, vector<16x512xf32>, vector<8x512xf32> -> vector<8x512xf32>
    %8 = arith.addf %3, %7 : vector<8x512xf32>
    %cst_8 = arith.constant 0.000000e+00 : f32
    %9 = vector.broadcast %cst_8 : f32 to vector<8x512xf32>
    %10 = arith.maximumf %8, %9 : vector<8x512xf32>
    %c0_9 = arith.constant 0 : index
    %c0_10 = arith.constant 0 : index
    %11 = vector.load %arg5[%c0_9, %c0_10] : memref<8x512xf32, #tpu.memory_space<vmem>>, vector<8x512xf32>
    tpu.vector_store %arg5[%c0_9, %c0_10], %10 {strides = array<i32>} : memref<8x512xf32, #tpu.memory_space<vmem>>, vector<8x512xf32>,
    return
  }
  func.func @transform_0(%arg0: i32) -> (i32, i32) {
    %c0_i32 = arith.constant 0 : i32
    %c0_i32_0 = arith.constant 0 : i32
    %c0_i32_1 = arith.constant 0 : i32
    return %c0_i32, %c0_i32_0 : i32, i32
  }
  func.func @transform_1(%arg0: i32) -> (i32, i32) {
    %c0_i32 = arith.constant 0 : i32
    %c0_i32_0 = arith.constant 0 : i32
    %c0_i32_1 = arith.constant 0 : i32
    return %c0_i32, %c0_i32_0 : i32, i32
  }
  func.func @transform_2(%arg0: i32) -> (i32, i32) {
    %c0_i32 = arith.constant 0 : i32
    %c0_i32_0 = arith.constant 0 : i32
    return %c0_i32, %arg0 : i32, i32
  }
  func.func @transform_3(%arg0: i32) -> (i32, i32) {
    %c0_i32 = arith.constant 0 : i32
    %c0_i32_0 = arith.constant 0 : i32
    return %c0_i32, %arg0 : i32, i32
  }
  func.func @transform_4(%arg0: i32) -> (i32, i32) {
    %c0_i32 = arith.constant 0 : i32
    %c0_i32_0 = arith.constant 0 : i32
    return %c0_i32, %arg0 : i32, i32
  }
}

</mosaic_0001>

<llo_original>
// kernel: tpu_custom_call.1
$region0: #{tpu_custom_call.1}
  #allocation0 [shape = 'u32[]', space=smem, size = 0x4, offset = 0x4, fixed_abs, tag = 'smem constant byte address 0x4 - core index']
  #allocation1 [shape = 'u32[144,128]{1,0:T(1,128)}', space=vmem, size = 0x12000, scoped, tag = 'internal scratch']
  %s0 = inlined_call_operand.hbm [shape: f32[8,1024], index: 0, kind: input, shape index: {}]
  %s1 = inlined_call_operand.hbm [shape: f32[8,16], index: 1, kind: input, shape index: {}]
  %s2 = inlined_call_operand.hbm [shape: bf16[1024,512], index: 2, kind: input, shape index: {}]
  %s3 = inlined_call_operand.hbm [shape: bf16[16,512], index: 3, kind: input, shape index: {}]
  %s4 = inlined_call_operand.hbm [shape: f32[8,512], index: 4, kind: output, shape index: {}]
  %s5 = sld [smem:[#allocation0]]
  $region42: #{tpu_custom_call.1} parent=0
    _
  %s7 = ssub.s32 1, %s5
  %s8 = scalar_select 0, %s7, %s5
  $region1: #{tpu_custom_call.1} parent=0
    #allocation2 [shape = 'u8[32768]{0}', space=vmem, size = 0x8000, scoped, tag = 'input window, operand 0, single buffered']
    #allocation3 [shape = 's32[1]{0}', space=sflag, size = 0x4, scoped, tag = 'scoped memory for tpu_custom_call.1']
    #allocation4 [shape = 's32[1]{0}', space=sflag, size = 0x4, scoped, tag = 'scoped memory for tpu_custom_call.1']
    #allocation5 [shape = 'u8[4096]{0}', space=vmem, size = 0x1000, scoped, tag = 'input window, operand 1, single buffered']
    #allocation6 [shape = 's32[1]{0}', space=sflag, size = 0x4, scoped, tag = 'scoped memory for tpu_custom_call.1']
    #allocation7 [shape = 'u8[1048576]{0}', space=vmem, size = 0x100000, scoped, tag = 'input window, operand 2, single buffered']
    #allocation8 [shape = 'u8[16384]{0}', space=vmem, size = 0x4000, scoped, tag = 'input window, operand 3, single buffered']
    #allocation9 [shape = 's32[1]{0}', space=sflag, size = 0x4, scoped, tag = 'scoped memory for tpu_custom_call.1']
    #allocation10 [shape = 'u8[16384]{0}', space=vmem, size = 0x4000, scoped, tag = 'output window, operand 0, single buffered']
    %9 = vsyncpa [#allocation3], 0
    %10 = vsyncpa [#allocation6], 0
    %11 = vsyncpa [#allocation9], 0
    %12 = vsyncpa [#allocation4], 0
    // Predicated region
    $region2: #{tpu_custom_call.1} parent=1 // pred_check
      _
    $region3: #{tpu_custom_call.1} parent=1 // pred_check_branch
      %14 = sbr.rel (0) target = $region5
    $region4: #{tpu_custom_call.1} parent=1 // pred_region
      %s16 = ssub.s32 1024, 1024
      %17 = vsyncadd [#allocation3], %s16
      %s19 = sshll.u32 [#allocation2], 4
      %s20 = int_to_ptr.vmem [resolvable:$true] %s19
      %22 = dma.hbm_to_vmem [thread:$0]  %s0, 1024, %s20, [#allocation3]
    $region5: #{tpu_custom_call.1} parent=1 // pred_fallthru
      _
    // Predicated region
    $region6: #{tpu_custom_call.1} parent=1 // pred_check
      _
    $region7: #{tpu_custom_call.1} parent=1 // pred_check_branch
      %24 = sbr.rel (0) target = $region9
    $region8: #{tpu_custom_call.1} parent=1 // pred_region
      %s26 = ssub.s32 128, 128
      %27 = vsyncadd [#allocation6], %s26
      %s29 = sshll.u32 [#allocation5], 4
      %s30 = int_to_ptr.vmem [resolvable:$true] %s29
      %32 = dma.hbm_to_vmem [thread:$0]  %s1, 128, %s30, [#allocation6]
    $region9: #{tpu_custom_call.1} parent=1 // pred_fallthru
      _
    // Predicated region
    $region10: #{tpu_custom_call.1} parent=1 // pred_check
      _
    $region11: #{tpu_custom_call.1} parent=1 // pred_check_branch
      %34 = sbr.rel (0) target = $region13
    $region12: #{tpu_custom_call.1} parent=1 // pred_region
      %s36 = ssub.s32 32768, 32768
      %37 = vsyncadd [#allocation6], %s36
      %s38 = sshll.u32 [#allocation7], 4
      %s39 = int_to_ptr.vmem [resolvable:$true] %s38
      %44 = dma.hbm_to_vmem [thread:$0]  %s2, 32768, %s39, [#allocation6], 256, 256, 16
    $region13: #{tpu_custom_call.1} parent=1 // pred_fallthru
      _
    // Predicated region
    $region14: #{tpu_custom_call.1} parent=1 // pred_check
      _
    $region15: #{tpu_custom_call.1} parent=1 // pred_check_branch
      %46 = sbr.rel (0) target = $region17
    $region16: #{tpu_custom_call.1} parent=1 // pred_region
      %s48 = ssub.s32 512, 512
      %49 = vsyncadd [#allocation9], %s48
      %s50 = sshll.u32 [#allocation8], 4
      %s51 = int_to_ptr.vmem [resolvable:$true] %s50
      %56 = dma.hbm_to_vmem [thread:$0]  %s3, 512, %s51, [#allocation9], 256, 256, 16
    $region17: #{tpu_custom_call.1} parent=1 // pred_fallthru
      _
    // Predicated region
    $region18: #{tpu_custom_call.1} parent=1 // pred_check
      _
    $region19: #{tpu_custom_call.1} parent=1 // pred_check_branch
      %58 = sbr.rel (0) target = $region21
    $region20: #{tpu_custom_call.1} parent=1 // pred_region
      %59 = dma.done [#allocation3], 1024
    $region21: #{tpu_custom_call.1} parent=1 // pred_fallthru
      _
    // Predicated region
    $region22: #{tpu_custom_call.1} parent=1 // pred_check
      _
    $region23: #{tpu_custom_call.1} parent=1 // pred_check_branch
      %61 = sbr.rel (0) target = $region25
    $region24: #{tpu_custom_call.1} parent=1 // pred_region
      %62 = dma.done [#allocation6], 128
    $region25: #{tpu_custom_call.1} parent=1 // pred_fallthru
      _
    // Predicated region
    $region26: #{tpu_custom_call.1} parent=1 // pred_check
      _
    $region27: #{tpu_custom_call.1} parent=1 // pred_check_branch
      %64 = sbr.rel (0) target = $region29
    $region28: #{tpu_custom_call.1} parent=1 // pred_region
      %65 = dma.done [#allocation6], 32768
    $region29: #{tpu_custom_call.1} parent=1 // pred_fallthru
      _
    // Predicated region
    $region30: #{tpu_custom_call.1} parent=1 // pred_check
      _
    $region31: #{tpu_custom_call.1} parent=1 // pred_check_branch
      %67 = sbr.rel (0) target = $region33
    $region32: #{tpu_custom_call.1} parent=1 // pred_region
      %68 = dma.done [#allocation9], 512
    $region33: #{tpu_custom_call.1} parent=1 // pred_fallthru
      _
    %v69 = vld [vmem:[#allocation2] sm:$0xff]
    %v70 = vld [vmem:[#allocation2 + $0x8] sm:$0xff]
    %v71 = vld [vmem:[#allocation2 + $0x10] sm:$0xff]
    %v72 = vld [vmem:[#allocation2 + $0x18] sm:$0xff]
    %v73 = vld [vmem:[#allocation2 + $0x20] sm:$0xff]
    %v74 = vld [vmem:[#allocation2 + $0x28] sm:$0xff]
    %v75 = vld [vmem:[#allocation2 + $0x30] sm:$0xff]
    %v76 = vld [vmem:[#allocation2 + $0x38] sm:$0xff]
    %v77 = vld [vmem:[#allocation7] sm:$0xff]
    %v78 = vld [vmem:[#allocation7 + $0x8] sm:$0xff]
    %v79 = vld [vmem:[#allocation7 + $0x10] sm:$0xff]
    %v80 = vld [vmem:[#allocation7 + $0x18] sm:$0xff]
    %v81 = vld [vmem:[#allocation7 + $0x20] sm:$0xff]
    %v82 = vld [vmem:[#allocation7 + $0x28] sm:$0xff]
    %v83 = vld [vmem:[#allocation7 + $0x30] sm:$0xff]
    %v84 = vld [vmem:[#allocation7 + $0x38] sm:$0xff]
    %v85 = vld [vmem:[#allocation7 + $0x40] sm:$0xff]
    %v86 = vld [vmem:[#allocation7 + $0x48] sm:$0xff]
    %v87 = vld [vmem:[#allocation7 + $0x50] sm:$0xff]
    %v88 = vld [vmem:[#allocation7 + $0x58] sm:$0xff]
    %v89 = vld [vmem:[#allocation7 + $0x60] sm:$0xff]
    %v90 = vld [vmem:[#allocation7 + $0x68] sm:$0xff]
    %v91 = vld [vmem:[#allocation7 + $0x70] sm:$0xff]
    %v92 = vld [vmem:[#allocation7 + $0x78] sm:$0xff]
    %v93 = vld [vmem:[#allocation7 + $0x80] sm:$0xff]
    %v94 = vld [vmem:[#allocation7 + $0x88] sm:$0xff]
    %v95 = vld [vmem:[#allocation7 + $0x90] sm:$0xff]
    %v96 = vld [vmem:[#allocation7 + $0x98] sm:$0xff]
    %v97 = vld [vmem:[#allocation7 + $0xa0] sm:$0xff]
    %v98 = vld [vmem:[#allocation7 + $0xa8] sm:$0xff]
    %v99 = vld [vmem:[#allocation7 + $0xb0] sm:$0xff]
    %v100 = vld [vmem:[#allocation7 + $0xb8] sm:$0xff]
    %v101 = vld [vmem:[#allocation7 + $0xc0] sm:$0xff]
    %v102 = vld [vmem:[#allocation7 + $0xc8] sm:$0xff]
    %v103 = vld [vmem:[#allocation7 + $0xd0] sm:$0xff]
    %v104 = vld [vmem:[#allocation7 + $0xd8] sm:$0xff]
    %v105 = vld [vmem:[#allocation7 + $0xe0] sm:$0xff]
    %v106 = vld [vmem:[#allocation7 + $0xe8] sm:$0xff]
    %v107 = vld [vmem:[#allocation7 + $0xf0] sm:$0xff]
    %v108 = vld [vmem:[#allocation7 + $0xf8] sm:$0xff]
    %v109 = vld [vmem:[#allocation7 + $0x100] sm:$0xff]
    %v110 = vld [vmem:[#allocation7 + $0x108] sm:$0xff]
    %v111 = vld [vmem:[#allocation7 + $0x110] sm:$0xff]
    %v112 = vld [vmem:[#allocation7 + $0x118] sm:$0xff]
    %v113 = vld [vmem:[#allocation7 + $0x120] sm:$0xff]
    %v114 = vld [vmem:[#allocation7 + $0x128] sm:$0xff]
    %v115 = vld [vmem:[#allocation7 + $0x130] sm:$0xff]
    %v116 = vld [vmem:[#allocation7 + $0x138] sm:$0xff]
    %v117 = vld [vmem:[#allocation7 + $0x140] sm:$0xff]
    %v118 = vld [vmem:[#allocation7 + $0x148] sm:$0xff]
    %v119 = vld [vmem:[#allocation7 + $0x150] sm:$0xff]
    %v120 = vld [vmem:[#allocation7 + $0x158] sm:$0xff]
    %v121 = vld [vmem:[#allocation7 + $0x160] sm:$0xff]
    %v122 = vld [vmem:[#allocation7 + $0x168] sm:$0xff]
    %v123 = vld [vmem:[#allocation7 + $0x170] sm:$0xff]
    %v124 = vld [vmem:[#allocation7 + $0x178] sm:$0xff]
    %v125 = vld [vmem:[#allocation7 + $0x180] sm:$0xff]
    %v126 = vld [vmem:[#allocation7 + $0x188] sm:$0xff]
    %v127 = vld [vmem:[#allocation7 + $0x190] sm:$0xff]
    %v128 = vld [vmem:[#allocation7 + $0x198] sm:$0xff]
    %v129 = vld [vmem:[#allocation7 + $0x1a0] sm:$0xff]
    %v130 = vld [vmem:[#allocation7 + $0x1a8] sm:$0xff]
    %v131 = vld [vmem:[#allocation7 + $0x1b0] sm:$0xff]
    %v132 = vld [vmem:[#allocation7 + $0x1b8] sm:$0xff]
    %v133 = vld [vmem:[#allocation7 + $0x1c0] sm:$0xff]
    %v134 = vld [vmem:[#allocation7 + $0x1c8] sm:$0xff]
    %v135 = vld [vmem:[#allocation7 + $0x1d0] sm:$0xff]
    %v136 = vld [vmem:[#allocation7 + $0x1d8] sm:$0xff]
    %v137 = vld [vmem:[#allocation7 + $0x1e0] sm:$0xff]
    %v138 = vld [vmem:[#allocation7 + $0x1e8] sm:$0xff]
    %v139 = vld [vmem:[#allocation7 + $0x1f0] sm:$0xff]
    %v140 = vld [vmem:[#allocation7 + $0x1f8] sm:$0xff]
    %v141 = vld [vmem:[#allocation7 + $0x200] sm:$0xff]
    %v142 = vld [vmem:[#allocation7 + $0x208] sm:$0xff]
    %v143 = vld [vmem:[#allocation7 + $0x210] sm:$0xff]
    %v144 = vld [vmem:[#allocation7 + $0x218] sm:$0xff]
    %v145 = vld [vmem:[#allocation7 + $0x220] sm:$0xff]
    %v146 = vld [vmem:[#allocation7 + $0x228] sm:$0xff]
    %v147 = vld [vmem:[#allocation7 + $0x230] sm:$0xff]
    %v148 = vld [vmem:[#allocation7 + $0x238] sm:$0xff]
    %v149 = vld [vmem:[#allocation7 + $0x240] sm:$0xff]
    %v150 = vld [vmem:[#allocation7 + $0x248] sm:$0xff]
    %v151 = vld [vmem:[#allocation7 + $0x250] sm:$0xff]
    %v152 = vld [vmem:[#allocation7 + $0x258] sm:$0xff]
    %v153 = vld [vmem:[#allocation7 + $0x260] sm:$0xff]
    %v154 = vld [vmem:[#allocation7 + $0x268] sm:$0xff]
    %v155 = vld [vmem:[#allocation7 + $0x270] sm:$0xff]
    %v156 = vld [vmem:[#allocation7 + $0x278] sm:$0xff]
    %v157 = vld [vmem:[#allocation7 + $0x280] sm:$0xff]
    %v158 = vld [vmem:[#allocation7 + $0x288] sm:$0xff]
    %v159 = vld [vmem:[#allocation7 + $0x290] sm:$0xff]
    %v160 = vld [vmem:[#allocation7 + $0x298] sm:$0xff]
    %v161 = vld [vmem:[#allocation7 + $0x2a0] sm:$0xff]
    %v162 = vld [vmem:[#allocation7 + $0x2a8] sm:$0xff]
    %v163 = vld [vmem:[#allocation7 + $0x2b0] sm:$0xff]
    %v164 = vld [vmem:[#allocation7 + $0x2b8] sm:$0xff]
    %v165 = vld [vmem:[#allocation7 + $0x2c0] sm:$0xff]
    %v166 = vld [vmem:[#allocation7 + $0x2c8] sm:$0xff]
    %v167 = vld [vmem:[#allocation7 + $0x2d0] sm:$0xff]
    %v168 = vld [vmem:[#allocation7 + $0x2d8] sm:$0xff]
    %v169 = vld [vmem:[#allocation7 + $0x2e0] sm:$0xff]
    %v170 = vld [vmem:[#allocation7 + $0x2e8] sm:$0xff]
    %v171 = vld [vmem:[#allocation7 + $0x2f0] sm:$0xff]
    %v172 = vld [vmem:[#allocation7 + $0x2f8] sm:$0xff]
    %v173 = vld [vmem:[#allocation7 + $0x300] sm:$0xff]
    %v174 = vld [vmem:[#allocation7 + $0x308] sm:$0xff]
    %v175 = vld [vmem:[#allocation7 + $0x310] sm:$0xff]
    %v176 = vld [vmem:[#allocation7 + $0x318] sm:$0xff]
    %v177 = vld [vmem:[#allocation7 + $0x320] sm:$0xff]
    %v178 = vld [vmem:[#allocation7 + $0x328] sm:$0xff]
    %v179 = vld [vmem:[#allocation7 + $0x330] sm:$0xff]
    %v180 = vld [vmem:[#allocation7 + $0x338] sm:$0xff]
    %v181 = vld [vmem:[#allocation7 + $0x340] sm:$0xff]
    %v182 = vld [vmem:[#allocation7 + $0x348] sm:$0xff]
    %v183 = vld [vmem:[#allocation7 + $0x350] sm:$0xff]
    %v184 = vld [vmem:[#allocation7 + $0x358] sm:$0xff]
    %v185 = vld [vmem:[#allocation7 + $0x360] sm:$0xff]
    %v186 = vld [vmem:[#allocation7 + $0x368] sm:$0xff]
    %v187 = vld [vmem:[#allocation7 + $0x370] sm:$0xff]
    %v188 = vld [vmem:[#allocation7 + $0x378] sm:$0xff]
    %v189 = vld [vmem:[#allocation7 + $0x380] sm:$0xff]
    %v190 = vld [vmem:[#allocation7 + $0x388] sm:$0xff]
    %v191 = vld [vmem:[#allocation7 + $0x390] sm:$0xff]
    %v192 = vld [vmem:[#allocation7 + $0x398] sm:$0xff]
    %v193 = vld [vmem:[#allocation7 + $0x3a0] sm:$0xff]
    %v194 = vld [vmem:[#allocation7 + $0x3a8] sm:$0xff]
    %v195 = vld [vmem:[#allocation7 + $0x3b0] sm:$0xff]
    %v196 = vld [vmem:[#allocation7 + $0x3b8] sm:$0xff]
    %v197 = vld [vmem:[#allocation7 + $0x3c0] sm:$0xff]
    %v198 = vld [vmem:[#allocation7 + $0x3c8] sm:$0xff]
    %v199 = vld [vmem:[#allocation7 + $0x3d0] sm:$0xff]
    %v200 = vld [vmem:[#allocation7 + $0x3d8] sm:$0xff]
    %v201 = vld [vmem:[#allocation7 + $0x3e0] sm:$0xff]
    %v202 = vld [vmem:[#allocation7 + $0x3e8] sm:$0xff]
    %v203 = vld [vmem:[#allocation7 + $0x3f0] sm:$0xff]
    %v204 = vld [vmem:[#allocation7 + $0x3f8] sm:$0xff]
    %v205 = vld [vmem:[#allocation7 + $0x400] sm:$0xff]
    %v206 = vld [vmem:[#allocation7 + $0x408] sm:$0xff]
    %v207 = vld [vmem:[#allocation7 + $0x410] sm:$0xff]
    %v208 = vld [vmem:[#allocation7 + $0x418] sm:$0xff]
    %v209 = vld [vmem:[#allocation7 + $0x420] sm:$0xff]
    %v210 = vld [vmem:[#allocation7 + $0x428] sm:$0xff]
    %v211 = vld [vmem:[#allocation7 + $0x430] sm:$0xff]
    %v212 = vld [vmem:[#allocation7 + $0x438] sm:$0xff]
    %v213 = vld [vmem:[#allocation7 + $0x440] sm:$0xff]
    %v214 = vld [vmem:[#allocation7 + $0x448] sm:$0xff]
    %v215 = vld [vmem:[#allocation7 + $0x450] sm:$0xff]
    %v216 = vld [vmem:[#allocation7 + $0x458] sm:$0xff]
    %v217 = vld [vmem:[#allocation7 + $0x460] sm:$0xff]
    %v218 = vld [vmem:[#allocation7 + $0x468] sm:$0xff]
    %v219 = vld [vmem:[#allocation7 + $0x470] sm:$0xff]
    %v220 = vld [vmem:[#allocation7 + $0x478] sm:$0xff]
    %v221 = vld [vmem:[#allocation7 + $0x480] sm:$0xff]
    %v222 = vld [vmem:[#allocation7 + $0x488] sm:$0xff]
    %v223 = vld [vmem:[#allocation7 + $0x490] sm:$0xff]
    %v224 = vld [vmem:[#allocation7 + $0x498] sm:$0xff]
    %v225 = vld [vmem:[#allocation7 + $0x4a0] sm:$0xff]
    %v226 = vld [vmem:[#allocation7 + $0x4a8] sm:$0xff]
    %v227 = vld [vmem:[#allocation7 + $0x4b0] sm:$0xff]
    %v228 = vld [vmem:[#allocation7 + $0x4b8] sm:$0xff]
    %v229 = vld [vmem:[#allocation7 + $0x4c0] sm:$0xff]
    %v230 = vld [vmem:[#allocation7 + $0x4c8] sm:$0xff]
    %v231 = vld [vmem:[#allocation7 + $0x4d0] sm:$0xff]
    %v232 = vld [vmem:[#allocation7 + $0x4d8] sm:$0xff]
    %v233 = vld [vmem:[#allocation7 + $0x4e0] sm:$0xff]
    %v234 = vld [vmem:[#allocation7 + $0x4e8] sm:$0xff]
    %v235 = vld [vmem:[#allocation7 + $0x4f0] sm:$0xff]
    %v236 = vld [vmem:[#allocation7 + $0x4f8] sm:$0xff]
    %v237 = vld [vmem:[#allocation7 + $0x500] sm:$0xff]
    %v238 = vld [vmem:[#allocation7 + $0x508] sm:$0xff]
    %v239 = vld [vmem:[#allocation7 + $0x510] sm:$0xff]
    %v240 = vld [vmem:[#allocation7 + $0x518] sm:$0xff]
    %v241 = vld [vmem:[#allocation7 + $0x520] sm:$0xff]
    %v242 = vld [vmem:[#allocation7 + $0x528] sm:$0xff]
    %v243 = vld [vmem:[#allocation7 + $0x530] sm:$0xff]
    %v244 = vld [vmem:[#allocation7 + $0x538] sm:$0xff]
    %v245 = vld [vmem:[#allocation7 + $0x540] sm:$0xff]
    %v246 = vld [vmem:[#allocation7 + $0x548] sm:$0xff]
    %v247 = vld [vmem:[#allocation7 + $0x550] sm:$0xff]
    %v248 = vld [vmem:[#allocation7 + $0x558] sm:$0xff]
    %v249 = vld [vmem:[#allocation7 + $0x560] sm:$0xff]
    %v250 = vld [vmem:[#allocation7 + $0x568] sm:$0xff]
    %v251 = vld [vmem:[#allocation7 + $0x570] sm:$0xff]
    %v252 = vld [vmem:[#allocation7 + $0x578] sm:$0xff]
    %v253 = vld [vmem:[#allocation7 + $0x580] sm:$0xff]
    %v254 = vld [vmem:[#allocation7 + $0x588] sm:$0xff]
    %v255 = vld [vmem:[#allocation7 + $0x590] sm:$0xff]
    %v256 = vld [vmem:[#allocation7 + $0x598] sm:$0xff]
    %v257 = vld [vmem:[#allocation7 + $0x5a0] sm:$0xff]
    %v258 = vld [vmem:[#allocation7 + $0x5a8] sm:$0xff]
    %v259 = vld [vmem:[#allocation7 + $0x5b0] sm:$0xff]
    %v260 = vld [vmem:[#allocation7 + $0x5b8] sm:$0xff]
    %v261 = vld [vmem:[#allocation7 + $0x5c0] sm:$0xff]
    %v262 = vld [vmem:[#allocation7 + $0x5c8] sm:$0xff]
    %v263 = vld [vmem:[#allocation7 + $0x5d0] sm:$0xff]
    %v264 = vld [vmem:[#allocation7 + $0x5d8] sm:$0xff]
    %v265 = vld [vmem:[#allocation7 + $0x5e0] sm:$0xff]
    %v266 = vld [vmem:[#allocation7 + $0x5e8] sm:$0xff]
    %v267 = vld [vmem:[#allocation7 + $0x5f0] sm:$0xff]
    %v268 = vld [vmem:[#allocation7 + $0x5f8] sm:$0xff]
    %v269 = vld [vmem:[#allocation7 + $0x600] sm:$0xff]
    %v270 = vld [vmem:[#allocation7 + $0x608] sm:$0xff]
    %v271 = vld [vmem:[#allocation7 + $0x610] sm:$0xff]
    %v272 = vld [vmem:[#allocation7 + $0x618] sm:$0xff]
    %v273 = vld [vmem:[#allocation7 + $0x620] sm:$0xff]
    %v274 = vld [vmem:[#allocation7 + $0x628] sm:$0xff]
    %v275 = vld [vmem:[#allocation7 + $0x630] sm:$0xff]
    %v276 = vld [vmem:[#allocation7 + $0x638] sm:$0xff]
    %v277 = vld [vmem:[#allocation7 + $0x640] sm:$0xff]
    %v278 = vld [vmem:[#allocation7 + $0x648] sm:$0xff]
    %v279 = vld [vmem:[#allocation7 + $0x650] sm:$0xff]
    %v280 = vld [vmem:[#allocation7 + $0x658] sm:$0xff]
    %v281 = vld [vmem:[#allocation7 + $0x660] sm:$0xff]
    %v282 = vld [vmem:[#allocation7 + $0x668] sm:$0xff]
    %v283 = vld [vmem:[#allocation7 + $0x670] sm:$0xff]
    %v284 = vld [vmem:[#allocation7 + $0x678] sm:$0xff]
    %v285 = vld [vmem:[#allocation7 + $0x680] sm:$0xff]
    %v286 = vld [vmem:[#allocation7 + $0x688] sm:$0xff]
    %v287 = vld [vmem:[#allocation7 + $0x690] sm:$0xff]
    %v288 = vld [vmem:[#allocation7 + $0x698] sm:$0xff]
    %v289 = vld [vmem:[#allocation7 + $0x6a0] sm:$0xff]
    %v290 = vld [vmem:[#allocation7 + $0x6a8] sm:$0xff]
    %v291 = vld [vmem:[#allocation7 + $0x6b0] sm:$0xff]
    %v292 = vld [vmem:[#allocation7 + $0x6b8] sm:$0xff]
    %v293 = vld [vmem:[#allocation7 + $0x6c0] sm:$0xff]
    %v294 = vld [vmem:[#allocation7 + $0x6c8] sm:$0xff]
    %v295 = vld [vmem:[#allocation7 + $0x6d0] sm:$0xff]
    %v296 = vld [vmem:[#allocation7 + $0x6d8] sm:$0xff]
    %v297 = vld [vmem:[#allocation7 + $0x6e0] sm:$0xff]
    %v298 = vld [vmem:[#allocation7 + $0x6e8] sm:$0xff]
    %v299 = vld [vmem:[#allocation7 + $0x6f0] sm:$0xff]
    %v300 = vld [vmem:[#allocation7 + $0x6f8] sm:$0xff]
    %v301 = vld [vmem:[#allocation7 + $0x700] sm:$0xff]
    %v302 = vld [vmem:[#allocation7 + $0x708] sm:$0xff]
    %v303 = vld [vmem:[#allocation7 + $0x710] sm:$0xff]
    %v304 = vld [vmem:[#allocation7 + $0x718] sm:$0xff]
    %v305 = vld [vmem:[#allocation7 + $0x720] sm:$0xff]
    %v306 = vld [vmem:[#allocation7 + $0x728] sm:$0xff]
    %v307 = vld [vmem:[#allocation7 + $0x730] sm:$0xff]
    %v308 = vld [vmem:[#allocation7 + $0x738] sm:$0xff]
    %v309 = vld [vmem:[#allocation7 + $0x740] sm:$0xff]
    %v310 = vld [vmem:[#allocation7 + $0x748] sm:$0xff]
    %v311 = vld [vmem:[#allocation7 + $0x750] sm:$0xff]
    %v312 = vld [vmem:[#allocation7 + $0x758] sm:$0xff]
    %v313 = vld [vmem:[#allocation7 + $0x760] sm:$0xff]
    %v314 = vld [vmem:[#allocation7 + $0x768] sm:$0xff]
    %v315 = vld [vmem:[#allocation7 + $0x770] sm:$0xff]
    %v316 = vld [vmem:[#allocation7 + $0x778] sm:$0xff]
    %v317 = vld [vmem:[#allocation7 + $0x780] sm:$0xff]
    %v318 = vld [vmem:[#allocation7 + $0x788] sm:$0xff]
    %v319 = vld [vmem:[#allocation7 + $0x790] sm:$0xff]
    %v320 = vld [vmem:[#allocation7 + $0x798] sm:$0xff]
    %v321 = vld [vmem:[#allocation7 + $0x7a0] sm:$0xff]
    %v322 = vld [vmem:[#allocation7 + $0x7a8] sm:$0xff]
    %v323 = vld [vmem:[#allocation7 + $0x7b0] sm:$0xff]
    %v324 = vld [vmem:[#allocation7 + $0x7b8] sm:$0xff]
    %v325 = vld [vmem:[#allocation7 + $0x7c0] sm:$0xff]
    %v326 = vld [vmem:[#allocation7 + $0x7c8] sm:$0xff]
    %v327 = vld [vmem:[#allocation7 + $0x7d0] sm:$0xff]
    %v328 = vld [vmem:[#allocation7 + $0x7d8] sm:$0xff]
    %v329 = vld [vmem:[#allocation7 + $0x7e0] sm:$0xff]
    %v330 = vld [vmem:[#allocation7 + $0x7e8] sm:$0xff]
    %v331 = vld [vmem:[#allocation7 + $0x7f0] sm:$0xff]
    %v332 = vld [vmem:[#allocation7 + $0x7f8] sm:$0xff]
    %v333 = vunpack.c.l.bf16 %v77
    %v334 = vunpack.c.h.bf16 %v77
    %v335 = vunpack.c.l.bf16 %v78
    %v336 = vunpack.c.h.bf16 %v78
    %v337 = vunpack.c.l.bf16 %v79
    %v338 = vunpack.c.h.bf16 %v79
    %v339 = vunpack.c.l.bf16 %v80
    %v340 = vunpack.c.h.bf16 %v80
    %v341 = vunpack.c.l.bf16 %v81
    %v342 = vunpack.c.h.bf16 %v81
    %v343 = vunpack.c.l.bf16 %v82
    %v344 = vunpack.c.h.bf16 %v82
    %v345 = vunpack.c.l.bf16 %v83
    %v346 = vunpack.c.h.bf16 %v83
    %v347 = vunpack.c.l.bf16 %v84
    %v348 = vunpack.c.h.bf16 %v84
    %v349 = vunpack.c.l.bf16 %v85
    %v350 = vunpack.c.h.bf16 %v85
    %v351 = vunpack.c.l.bf16 %v86
    %v352 = vunpack.c.h.bf16 %v86
    %v353 = vunpack.c.l.bf16 %v87
    %v354 = vunpack.c.h.bf16 %v87
    %v355 = vunpack.c.l.bf16 %v88
    %v356 = vunpack.c.h.bf16 %v88
    %v357 = vunpack.c.l.bf16 %v89
    %v358 = vunpack.c.h.bf16 %v89
    %v359 = vunpack.c.l.bf16 %v90
    %v360 = vunpack.c.h.bf16 %v90
    %v361 = vunpack.c.l.bf16 %v91
    %v362 = vunpack.c.h.bf16 %v91
    %v363 = vunpack.c.l.bf16 %v92
    %v364 = vunpack.c.h.bf16 %v92
    %v365 = vunpack.c.l.bf16 %v93
    %v366 = vunpack.c.h.bf16 %v93
    %v367 = vunpack.c.l.bf16 %v94
    %v368 = vunpack.c.h.bf16 %v94
    %v369 = vunpack.c.l.bf16 %v95
    %v370 = vunpack.c.h.bf16 %v95
    %v371 = vunpack.c.l.bf16 %v96
    %v372 = vunpack.c.h.bf16 %v96
    %v373 = vunpack.c.l.bf16 %v97
    %v374 = vunpack.c.h.bf16 %v97
    %v375 = vunpack.c.l.bf16 %v98
    %v376 = vunpack.c.h.bf16 %v98
    %v377 = vunpack.c.l.bf16 %v99
    %v378 = vunpack.c.h.bf16 %v99
    %v379 = vunpack.c.l.bf16 %v100
    %v380 = vunpack.c.h.bf16 %v100
    %v381 = vunpack.c.l.bf16 %v101
    %v382 = vunpack.c.h.bf16 %v101
    %v383 = vunpack.c.l.bf16 %v102
    %v384 = vunpack.c.h.bf16 %v102
    %v385 = vunpack.c.l.bf16 %v103
    %v386 = vunpack.c.h.bf16 %v103
    %v387 = vunpack.c.l.bf16 %v104
    %v388 = vunpack.c.h.bf16 %v104
    %v389 = vunpack.c.l.bf16 %v105
    %v390 = vunpack.c.h.bf16 %v105
    %v391 = vunpack.c.l.bf16 %v106
    %v392 = vunpack.c.h.bf16 %v106
    %v393 = vunpack.c.l.bf16 %v107
    %v394 = vunpack.c.h.bf16 %v107
    %v395 = vunpack.c.l.bf16 %v108
    %v396 = vunpack.c.h.bf16 %v108
    %v397 = vunpack.c.l.bf16 %v109
    %v398 = vunpack.c.h.bf16 %v109
    %v399 = vunpack.c.l.bf16 %v110
    %v400 = vunpack.c.h.bf16 %v110
    %v401 = vunpack.c.l.bf16 %v111
    %v402 = vunpack.c.h.bf16 %v111
    %v403 = vunpack.c.l.bf16 %v112
    %v404 = vunpack.c.h.bf16 %v112
    %v405 = vunpack.c.l.bf16 %v113
    %v406 = vunpack.c.h.bf16 %v113
    %v407 = vunpack.c.l.bf16 %v114
    %v408 = vunpack.c.h.bf16 %v114
    %v409 = vunpack.c.l.bf16 %v115
    %v410 = vunpack.c.h.bf16 %v115
    %v411 = vunpack.c.l.bf16 %v116
    %v412 = vunpack.c.h.bf16 %v116
    %v413 = vunpack.c.l.bf16 %v117
    %v414 = vunpack.c.h.bf16 %v117
    %v415 = vunpack.c.l.bf16 %v118
    %v416 = vunpack.c.h.bf16 %v118
    %v417 = vunpack.c.l.bf16 %v119
    %v418 = vunpack.c.h.bf16 %v119
    %v419 = vunpack.c.l.bf16 %v120
    %v420 = vunpack.c.h.bf16 %v120
    %v421 = vunpack.c.l.bf16 %v121
    %v422 = vunpack.c.h.bf16 %v121
    %v423 = vunpack.c.l.bf16 %v122
    %v424 = vunpack.c.h.bf16 %v122
    %v425 = vunpack.c.l.bf16 %v123
    %v426 = vunpack.c.h.bf16 %v123
    %v427 = vunpack.c.l.bf16 %v124
    %v428 = vunpack.c.h.bf16 %v124
    %v429 = vunpack.c.l.bf16 %v125
    %v430 = vunpack.c.h.bf16 %v125
    %v431 = vunpack.c.l.bf16 %v126
    %v432 = vunpack.c.h.bf16 %v126
    %v433 = vunpack.c.l.bf16 %v127
    %v434 = vunpack.c.h.bf16 %v127
    %v435 = vunpack.c.l.bf16 %v128
    %v436 = vunpack.c.h.bf16 %v128
    %v437 = vunpack.c.l.bf16 %v129
    %v438 = vunpack.c.h.bf16 %v129
    %v439 = vunpack.c.l.bf16 %v130
    %v440 = vunpack.c.h.bf16 %v130
    %v441 = vunpack.c.l.bf16 %v131
    %v442 = vunpack.c.h.bf16 %v131
    %v443 = vunpack.c.l.bf16 %v132
    %v444 = vunpack.c.h.bf16 %v132
    %v445 = vunpack.c.l.bf16 %v133
    %v446 = vunpack.c.h.bf16 %v133
    %v447 = vunpack.c.l.bf16 %v134
    %v448 = vunpack.c.h.bf16 %v134
    %v449 = vunpack.c.l.bf16 %v135
    %v450 = vunpack.c.h.bf16 %v135
    %v451 = vunpack.c.l.bf16 %v136
    %v452 = vunpack.c.h.bf16 %v136
    %v453 = vunpack.c.l.bf16 %v137
    %v454 = vunpack.c.h.bf16 %v137
    %v455 = vunpack.c.l.bf16 %v138
    %v456 = vunpack.c.h.bf16 %v138
    %v457 = vunpack.c.l.bf16 %v139
    %v458 = vunpack.c.h.bf16 %v139
    %v459 = vunpack.c.l.bf16 %v140
    %v460 = vunpack.c.h.bf16 %v140
    %v461 = vunpack.c.l.bf16 %v141
    %v462 = vunpack.c.h.bf16 %v141
    %v463 = vunpack.c.l.bf16 %v142
    %v464 = vunpack.c.h.bf16 %v142
    %v465 = vunpack.c.l.bf16 %v143
    %v466 = vunpack.c.h.bf16 %v143
    %v467 = vunpack.c.l.bf16 %v144
    %v468 = vunpack.c.h.bf16 %v144
    %v469 = vunpack.c.l.bf16 %v145
    %v470 = vunpack.c.h.bf16 %v145
    %v471 = vunpack.c.l.bf16 %v146
    %v472 = vunpack.c.h.bf16 %v146
    %v473 = vunpack.c.l.bf16 %v147
    %v474 = vunpack.c.h.bf16 %v147
    %v475 = vunpack.c.l.bf16 %v148
    %v476 = vunpack.c.h.bf16 %v148
    %v477 = vunpack.c.l.bf16 %v149
    %v478 = vunpack.c.h.bf16 %v149
    %v479 = vunpack.c.l.bf16 %v150
    %v480 = vunpack.c.h.bf16 %v150
    %v481 = vunpack.c.l.bf16 %v151
    %v482 = vunpack.c.h.bf16 %v151
    %v483 = vunpack.c.l.bf16 %v152
    %v484 = vunpack.c.h.bf16 %v152
    %v485 = vunpack.c.l.bf16 %v153
    %v486 = vunpack.c.h.bf16 %v153
    %v487 = vunpack.c.l.bf16 %v154
    %v488 = vunpack.c.h.bf16 %v154
    %v489 = vunpack.c.l.bf16 %v155
    %v490 = vunpack.c.h.bf16 %v155
    %v491 = vunpack.c.l.bf16 %v156
    %v492 = vunpack.c.h.bf16 %v156
    %v493 = vunpack.c.l.bf16 %v157
    %v494 = vunpack.c.h.bf16 %v157
    %v495 = vunpack.c.l.bf16 %v158
    %v496 = vunpack.c.h.bf16 %v158
    %v497 = vunpack.c.l.bf16 %v159
    %v498 = vunpack.c.h.bf16 %v159
    %v499 = vunpack.c.l.bf16 %v160
    %v500 = vunpack.c.h.bf16 %v160
    %v501 = vunpack.c.l.bf16 %v161
    %v502 = vunpack.c.h.bf16 %v161
    %v503 = vunpack.c.l.bf16 %v162
    %v504 = vunpack.c.h.bf16 %v162
    %v505 = vunpack.c.l.bf16 %v163
    %v506 = vunpack.c.h.bf16 %v163
    %v507 = vunpack.c.l.bf16 %v164
    %v508 = vunpack.c.h.bf16 %v164
    %v509 = vunpack.c.l.bf16 %v165
    %v510 = vunpack.c.h.bf16 %v165
    %v511 = vunpack.c.l.bf16 %v166
    %v512 = vunpack.c.h.bf16 %v166
    %v513 = vunpack.c.l.bf16 %v167
    %v514 = vunpack.c.h.bf16 %v167
    %v515 = vunpack.c.l.bf16 %v168
    %v516 = vunpack.c.h.bf16 %v168
    %v517 = vunpack.c.l.bf16 %v169
    %v518 = vunpack.c.h.bf16 %v169
    %v519 = vunpack.c.l.bf16 %v170
    %v520 = vunpack.c.h.bf16 %v170
    %v521 = vunpack.c.l.bf16 %v171
    %v522 = vunpack.c.h.bf16 %v171
    %v523 = vunpack.c.l.bf16 %v172
    %v524 = vunpack.c.h.bf16 %v172
    %v525 = vunpack.c.l.bf16 %v173
    %v526 = vunpack.c.h.bf16 %v173
    %v527 = vunpack.c.l.bf16 %v174
    %v528 = vunpack.c.h.bf16 %v174
    %v529 = vunpack.c.l.bf16 %v175
    %v530 = vunpack.c.h.bf16 %v175
    %v531 = vunpack.c.l.bf16 %v176
    %v532 = vunpack.c.h.bf16 %v176
    %v533 = vunpack.c.l.bf16 %v177
    %v534 = vunpack.c.h.bf16 %v177
    %v535 = vunpack.c.l.bf16 %v178
    %v536 = vunpack.c.h.bf16 %v178
    %v537 = vunpack.c.l.bf16 %v179
    %v538 = vunpack.c.h.bf16 %v179
    %v539 = vunpack.c.l.bf16 %v180
    %v540 = vunpack.c.h.bf16 %v180
    %v541 = vunpack.c.l.bf16 %v181
    %v542 = vunpack.c.h.bf16 %v181
    %v543 = vunpack.c.l.bf16 %v182
    %v544 = vunpack.c.h.bf16 %v182
    %v545 = vunpack.c.l.bf16 %v183
    %v546 = vunpack.c.h.bf16 %v183
    %v547 = vunpack.c.l.bf16 %v184
    %v548 = vunpack.c.h.bf16 %v184
    %v549 = vunpack.c.l.bf16 %v185
    %v550 = vunpack.c.h.bf16 %v185
    %v551 = vunpack.c.l.bf16 %v186
    %v552 = vunpack.c.h.bf16 %v186
    %v553 = vunpack.c.l.bf16 %v187
    %v554 = vunpack.c.h.bf16 %v187
    %v555 = vunpack.c.l.bf16 %v188
    %v556 = vunpack.c.h.bf16 %v188
    %v557 = vunpack.c.l.bf16 %v189
    %v558 = vunpack.c.h.bf16 %v189
    %v559 = vunpack.c.l.bf16 %v190
    %v560 = vunpack.c.h.bf16 %v190
    %v561 = vunpack.c.l.bf16 %v191
    %v562 = vunpack.c.h.bf16 %v191
    %v563 = vunpack.c.l.bf16 %v192
    %v564 = vunpack.c.h.bf16 %v192
    %v565 = vunpack.c.l.bf16 %v193
    %v566 = vunpack.c.h.bf16 %v193
    %v567 = vunpack.c.l.bf16 %v194
    %v568 = vunpack.c.h.bf16 %v194
    %v569 = vunpack.c.l.bf16 %v195
    %v570 = vunpack.c.h.bf16 %v195
    %v571 = vunpack.c.l.bf16 %v196
    %v572 = vunpack.c.h.bf16 %v196
    %v573 = vunpack.c.l.bf16 %v197
    %v574 = vunpack.c.h.bf16 %v197
    %v575 = vunpack.c.l.bf16 %v198
    %v576 = vunpack.c.h.bf16 %v198
    %v577 = vunpack.c.l.bf16 %v199
    %v578 = vunpack.c.h.bf16 %v199
    %v579 = vunpack.c.l.bf16 %v200
    %v580 = vunpack.c.h.bf16 %v200
    %v581 = vunpack.c.l.bf16 %v201
    %v582 = vunpack.c.h.bf16 %v201
    %v583 = vunpack.c.l.bf16 %v202
    %v584 = vunpack.c.h.bf16 %v202
    %v585 = vunpack.c.l.bf16 %v203
    %v586 = vunpack.c.h.bf16 %v203
    %v587 = vunpack.c.l.bf16 %v204
    %v588 = vunpack.c.h.bf16 %v204
    %v589 = vunpack.c.l.bf16 %v205
    %v590 = vunpack.c.h.bf16 %v205
    %v591 = vunpack.c.l.bf16 %v206
    %v592 = vunpack.c.h.bf16 %v206
    %v593 = vunpack.c.l.bf16 %v207
    %v594 = vunpack.c.h.bf16 %v207
    %v595 = vunpack.c.l.bf16 %v208
    %v596 = vunpack.c.h.bf16 %v208
    %v597 = vunpack.c.l.bf16 %v209
    %v598 = vunpack.c.h.bf16 %v209
    %v599 = vunpack.c.l.bf16 %v210
    %v600 = vunpack.c.h.bf16 %v210
    %v601 = vunpack.c.l.bf16 %v211
    %v602 = vunpack.c.h.bf16 %v211
    %v603 = vunpack.c.l.bf16 %v212
    %v604 = vunpack.c.h.bf16 %v212
    %v605 = vunpack.c.l.bf16 %v213
    %v606 = vunpack.c.h.bf16 %v213
    %v607 = vunpack.c.l.bf16 %v214
    %v608 = vunpack.c.h.bf16 %v214
    %v609 = vunpack.c.l.bf16 %v215
    %v610 = vunpack.c.h.bf16 %v215
    %v611 = vunpack.c.l.bf16 %v216
    %v612 = vunpack.c.h.bf16 %v216
    %v613 = vunpack.c.l.bf16 %v217
    %v614 = vunpack.c.h.bf16 %v217
    %v615 = vunpack.c.l.bf16 %v218
    %v616 = vunpack.c.h.bf16 %v218
    %v617 = vunpack.c.l.bf16 %v219
    %v618 = vunpack.c.h.bf16 %v219
    %v619 = vunpack.c.l.bf16 %v220
    %v620 = vunpack.c.h.bf16 %v220
    %v621 = vunpack.c.l.bf16 %v221
    %v622 = vunpack.c.h.bf16 %v221
    %v623 = vunpack.c.l.bf16 %v222
    %v624 = vunpack.c.h.bf16 %v222
    %v625 = vunpack.c.l.bf16 %v223
    %v626 = vunpack.c.h.bf16 %v223
    %v627 = vunpack.c.l.bf16 %v224
    %v628 = vunpack.c.h.bf16 %v224
    %v629 = vunpack.c.l.bf16 %v225
    %v630 = vunpack.c.h.bf16 %v225
    %v631 = vunpack.c.l.bf16 %v226
    %v632 = vunpack.c.h.bf16 %v226
    %v633 = vunpack.c.l.bf16 %v227
    %v634 = vunpack.c.h.bf16 %v227
    %v635 = vunpack.c.l.bf16 %v228
    %v636 = vunpack.c.h.bf16 %v228
    %v637 = vunpack.c.l.bf16 %v229
    %v638 = vunpack.c.h.bf16 %v229
    %v639 = vunpack.c.l.bf16 %v230
    %v640 = vunpack.c.h.bf16 %v230
    %v641 = vunpack.c.l.bf16 %v231
    %v642 = vunpack.c.h.bf16 %v231
    %v643 = vunpack.c.l.bf16 %v232
    %v644 = vunpack.c.h.bf16 %v232
    %v645 = vunpack.c.l.bf16 %v233
    %v646 = vunpack.c.h.bf16 %v233
    %v647 = vunpack.c.l.bf16 %v234
    %v648 = vunpack.c.h.bf16 %v234
    %v649 = vunpack.c.l.bf16 %v235
    %v650 = vunpack.c.h.bf16 %v235
    %v651 = vunpack.c.l.bf16 %v236
    %v652 = vunpack.c.h.bf16 %v236
    %v653 = vunpack.c.l.bf16 %v237
    %v654 = vunpack.c.h.bf16 %v237
    %v655 = vunpack.c.l.bf16 %v238
    %v656 = vunpack.c.h.bf16 %v238
    %v657 = vunpack.c.l.bf16 %v239
    %v658 = vunpack.c.h.bf16 %v239
    %v659 = vunpack.c.l.bf16 %v240
    %v660 = vunpack.c.h.bf16 %v240
    %v661 = vunpack.c.l.bf16 %v241
    %v662 = vunpack.c.h.bf16 %v241
    %v663 = vunpack.c.l.bf16 %v242
    %v664 = vunpack.c.h.bf16 %v242
    %v665 = vunpack.c.l.bf16 %v243
    %v666 = vunpack.c.h.bf16 %v243
    %v667 = vunpack.c.l.bf16 %v244
    %v668 = vunpack.c.h.bf16 %v244
    %v669 = vunpack.c.l.bf16 %v245
    %v670 = vunpack.c.h.bf16 %v245
    %v671 = vunpack.c.l.bf16 %v246
    %v672 = vunpack.c.h.bf16 %v246
    %v673 = vunpack.c.l.bf16 %v247
    %v674 = vunpack.c.h.bf16 %v247
    %v675 = vunpack.c.l.bf16 %v248
    %v676 = vunpack.c.h.bf16 %v248
    %v677 = vunpack.c.l.bf16 %v249
    %v678 = vunpack.c.h.bf16 %v249
    %v679 = vunpack.c.l.bf16 %v250
    %v680 = vunpack.c.h.bf16 %v250
    %v681 = vunpack.c.l.bf16 %v251
    %v682 = vunpack.c.h.bf16 %v251
    %v683 = vunpack.c.l.bf16 %v252
    %v684 = vunpack.c.h.bf16 %v252
    %v685 = vunpack.c.l.bf16 %v253
    %v686 = vunpack.c.h.bf16 %v253
    %v687 = vunpack.c.l.bf16 %v254
    %v688 = vunpack.c.h.bf16 %v254
    %v689 = vunpack.c.l.bf16 %v255
    %v690 = vunpack.c.h.bf16 %v255
    %v691 = vunpack.c.l.bf16 %v256
    %v692 = vunpack.c.h.bf16 %v256
    %v693 = vunpack.c.l.bf16 %v257
    %v694 = vunpack.c.h.bf16 %v257
    %v695 = vunpack.c.l.bf16 %v258
    %v696 = vunpack.c.h.bf16 %v258
    %v697 = vunpack.c.l.bf16 %v259
    %v698 = vunpack.c.h.bf16 %v259
    %v699 = vunpack.c.l.bf16 %v260
    %v700 = vunpack.c.h.bf16 %v260
    %v701 = vunpack.c.l.bf16 %v261
    %v702 = vunpack.c.h.bf16 %v261
    %v703 = vunpack.c.l.bf16 %v262
    %v704 = vunpack.c.h.bf16 %v262
    %v705 = vunpack.c.l.bf16 %v263
    %v706 = vunpack.c.h.bf16 %v263
    %v707 = vunpack.c.l.bf16 %v264
    %v708 = vunpack.c.h.bf16 %v264
    %v709 = vunpack.c.l.bf16 %v265
    %v710 = vunpack.c.h.bf16 %v265
    %v711 = vunpack.c.l.bf16 %v266
    %v712 = vunpack.c.h.bf16 %v266
    %v713 = vunpack.c.l.bf16 %v267
    %v714 = vunpack.c.h.bf16 %v267
    %v715 = vunpack.c.l.bf16 %v268
    %v716 = vunpack.c.h.bf16 %v268
    %v717 = vunpack.c.l.bf16 %v269
    %v718 = vunpack.c.h.bf16 %v269
    %v719 = vunpack.c.l.bf16 %v270
    %v720 = vunpack.c.h.bf16 %v270
    %v721 = vunpack.c.l.bf16 %v271
    %v722 = vunpack.c.h.bf16 %v271
    %v723 = vunpack.c.l.bf16 %v272
    %v724 = vunpack.c.h.bf16 %v272
    %v725 = vunpack.c.l.bf16 %v273
    %v726 = vunpack.c.h.bf16 %v273
    %v727 = vunpack.c.l.bf16 %v274
    %v728 = vunpack.c.h.bf16 %v274
    %v729 = vunpack.c.l.bf16 %v275
    %v730 = vunpack.c.h.bf16 %v275
    %v731 = vunpack.c.l.bf16 %v276
    %v732 = vunpack.c.h.bf16 %v276
    %v733 = vunpack.c.l.bf16 %v277
    %v734 = vunpack.c.h.bf16 %v277
    %v735 = vunpack.c.l.bf16 %v278
    %v736 = vunpack.c.h.bf16 %v278
    %v737 = vunpack.c.l.bf16 %v279
    %v738 = vunpack.c.h.bf16 %v279
    %v739 = vunpack.c.l.bf16 %v280
    %v740 = vunpack.c.h.bf16 %v280
    %v741 = vunpack.c.l.bf16 %v281
    %v742 = vunpack.c.h.bf16 %v281
    %v743 = vunpack.c.l.bf16 %v282
    %v744 = vunpack.c.h.bf16 %v282
    %v745 = vunpack.c.l.bf16 %v283
    %v746 = vunpack.c.h.bf16 %v283
    %v747 = vunpack.c.l.bf16 %v284
    %v748 = vunpack.c.h.bf16 %v284
    %v749 = vunpack.c.l.bf16 %v285
    %v750 = vunpack.c.h.bf16 %v285
    %v751 = vunpack.c.l.bf16 %v286
    %v752 = vunpack.c.h.bf16 %v286
    %v753 = vunpack.c.l.bf16 %v287
    %v754 = vunpack.c.h.bf16 %v287
    %v755 = vunpack.c.l.bf16 %v288
    %v756 = vunpack.c.h.bf16 %v288
    %v757 = vunpack.c.l.bf16 %v289
    %v758 = vunpack.c.h.bf16 %v289
    %v759 = vunpack.c.l.bf16 %v290
    %v760 = vunpack.c.h.bf16 %v290
    %v761 = vunpack.c.l.bf16 %v291
    %v762 = vunpack.c.h.bf16 %v291
    %v763 = vunpack.c.l.bf16 %v292
    %v764 = vunpack.c.h.bf16 %v292
    %v765 = vunpack.c.l.bf16 %v293
    %v766 = vunpack.c.h.bf16 %v293
    %v767 = vunpack.c.l.bf16 %v294
    %v768 = vunpack.c.h.bf16 %v294
    %v769 = vunpack.c.l.bf16 %v295
    %v770 = vunpack.c.h.bf16 %v295
    %v771 = vunpack.c.l.bf16 %v296
    %v772 = vunpack.c.h.bf16 %v296
    %v773 = vunpack.c.l.bf16 %v297
    %v774 = vunpack.c.h.bf16 %v297
    %v775 = vunpack.c.l.bf16 %v298
    %v776 = vunpack.c.h.bf16 %v298
    %v777 = vunpack.c.l.bf16 %v299
    %v778 = vunpack.c.h.bf16 %v299
    %v779 = vunpack.c.l.bf16 %v300
    %v780 = vunpack.c.h.bf16 %v300
    %v781 = vunpack.c.l.bf16 %v301
    %v782 = vunpack.c.h.bf16 %v301
    %v783 = vunpack.c.l.bf16 %v302
    %v784 = vunpack.c.h.bf16 %v302
    %v785 = vunpack.c.l.bf16 %v303
    %v786 = vunpack.c.h.bf16 %v303
    %v787 = vunpack.c.l.bf16 %v304
    %v788 = vunpack.c.h.bf16 %v304
    %v789 = vunpack.c.l.bf16 %v305
    %v790 = vunpack.c.h.bf16 %v305
    %v791 = vunpack.c.l.bf16 %v306
    %v792 = vunpack.c.h.bf16 %v306
    %v793 = vunpack.c.l.bf16 %v307
    %v794 = vunpack.c.h.bf16 %v307
    %v795 = vunpack.c.l.bf16 %v308
    %v796 = vunpack.c.h.bf16 %v308
    %v797 = vunpack.c.l.bf16 %v309
    %v798 = vunpack.c.h.bf16 %v309
    %v799 = vunpack.c.l.bf16 %v310
    %v800 = vunpack.c.h.bf16 %v310
    %v801 = vunpack.c.l.bf16 %v311
    %v802 = vunpack.c.h.bf16 %v311
    %v803 = vunpack.c.l.bf16 %v312
    %v804 = vunpack.c.h.bf16 %v312
    %v805 = vunpack.c.l.bf16 %v313
    %v806 = vunpack.c.h.bf16 %v313
    %v807 = vunpack.c.l.bf16 %v314
    %v808 = vunpack.c.h.bf16 %v314
    %v809 = vunpack.c.l.bf16 %v315
    %v810 = vunpack.c.h.bf16 %v315
    %v811 = vunpack.c.l.bf16 %v316
    %v812 = vunpack.c.h.bf16 %v316
    %v813 = vunpack.c.l.bf16 %v317
    %v814 = vunpack.c.h.bf16 %v317
    %v815 = vunpack.c.l.bf16 %v318
    %v816 = vunpack.c.h.bf16 %v318
    %v817 = vunpack.c.l.bf16 %v319
    %v818 = vunpack.c.h.bf16 %v319
    %v819 = vunpack.c.l.bf16 %v320
    %v820 = vunpack.c.h.bf16 %v320
    %v821 = vunpack.c.l.bf16 %v321
    %v822 = vunpack.c.h.bf16 %v321
    %v823 = vunpack.c.l.bf16 %v322
    %v824 = vunpack.c.h.bf16 %v322
    %v825 = vunpack.c.l.bf16 %v323
    %v826 = vunpack.c.h.bf16 %v323
    %v827 = vunpack.c.l.bf16 %v324
    %v828 = vunpack.c.h.bf16 %v324
    %v829 = vunpack.c.l.bf16 %v325
    %v830 = vunpack.c.h.bf16 %v325
    %v831 = vunpack.c.l.bf16 %v326
    %v832 = vunpack.c.h.bf16 %v326
    %v833 = vunpack.c.l.bf16 %v327
    %v834 = vunpack.c.h.bf16 %v327
    %v835 = vunpack.c.l.bf16 %v328
    %v836 = vunpack.c.h.bf16 %v328
    %v837 = vunpack.c.l.bf16 %v329
    %v838 = vunpack.c.h.bf16 %v329
    %v839 = vunpack.c.l.bf16 %v330
    %v840 = vunpack.c.h.bf16 %v330
    %v841 = vunpack.c.l.bf16 %v331
    %v842 = vunpack.c.h.bf16 %v331
    %v843 = vunpack.c.l.bf16 %v332
    %v844 = vunpack.c.h.bf16 %v332
    %v845 = vld [vmem:[#allocation5] sm:$0xff]
    %v846 = vld [vmem:[#allocation8] sm:$0xff]
    %v847 = vld [vmem:[#allocation8 + $0x8] sm:$0xff]
    %v848 = vld [vmem:[#allocation8 + $0x10] sm:$0xff]
    %v849 = vld [vmem:[#allocation8 + $0x18] sm:$0xff]
    %v850 = vunpack.c.l.bf16 %v846
    %v851 = vunpack.c.h.bf16 %v846
    %v852 = vunpack.c.l.bf16 %v847
    %v853 = vunpack.c.h.bf16 %v847
    %v854 = vunpack.c.l.bf16 %v848
    %v855 = vunpack.c.h.bf16 %v848
    %v856 = vunpack.c.l.bf16 %v849
    %v857 = vunpack.c.h.bf16 %v849
    %vm858 = vcmask 130048
    %v860 = vsel %vm858, %v845, 0
    %862 = vmatprep.subr.mxu0 %v851
    %863 = vmatpush1.msra.mxu0 %v850
    %864 = vmatprep.subr.mxu0 %v855
    %865 = vmatpush1.msra.mxu0 %v854
    %866 = vmatprep.subr.mxu0 0.0
    %867 = vmatpush1.msra.mxu0 0.0
    %868 = vmatprep.subr.mxu0 0.0
    %869 = vmatpush1.msra.mxu0 0.0
    %870 = vmatprep.subr.mxu0 0.0
    %871 = vmatpush1.msra.mxu0 0.0
    %872 = vmatprep.subr.mxu0 0.0
    %873 = vmatpush1.msra.mxu0 0.0
    %874 = vmatprep.subr.mxu0 0.0
    %875 = vmatpush1.msra.mxu0 0.0
    %876 = vmatprep.subr.mxu0 0.0
    %877 = vmatpush1.msra.mxu0 0.0
    %878 = vmatprep.subr.mxu0 0.0
    %879 = vmatpush1.msra.mxu0 0.0
    %880 = vmatprep.subr.mxu0 0.0
    %881 = vmatpush1.msra.mxu0 0.0
    %882 = vmatprep.subr.mxu0 0.0
    %883 = vmatpush1.msra.mxu0 0.0
    %884 = vmatprep.subr.mxu0 0.0
    %885 = vmatpush1.msra.mxu0 0.0
    %886 = vmatprep.subr.mxu0 0.0
    %887 = vmatpush1.msra.mxu0 0.0
    %888 = vmatprep.subr.mxu0 0.0
    %889 = vmatpush1.msra.mxu0 0.0
    %890 = vmatprep.subr.mxu0 0.0
    %891 = vmatpush1.msra.mxu0 0.0
    %892 = vmatprep.subr.mxu0 0.0
    %893 = vmatpush1.msra.mxu0 0.0
    %894 = vmatprep.subr.mxu0 0.0
    %895 = vmatpush1.msra.mxu0 0.0
    %896 = vmatprep.subr.mxu0 0.0
    %897 = vmatpush1.msra.mxu0 0.0
    %898 = vmatprep.subr.mxu0 0.0
    %899 = vmatpush1.msra.mxu0 0.0
    %900 = vmatprep.subr.mxu0 0.0
    %901 = vmatpush1.msra.mxu0 0.0
    %902 = vmatprep.subr.mxu0 0.0
    %903 = vmatpush1.msra.mxu0 0.0
    %904 = vmatprep.subr.mxu0 0.0
    %905 = vmatpush1.msra.mxu0 0.0
    %906 = vmatprep.subr.mxu0 0.0
    %907 = vmatpush1.msra.mxu0 0.0
    %908 = vmatprep.subr.mxu0 0.0
    %909 = vmatpush1.msra.mxu0 0.0
    %910 = vmatprep.subr.mxu0 0.0
    %911 = vmatpush1.msra.mxu0 0.0
    %912 = vmatprep.subr.mxu0 0.0
    %913 = vmatpush1.msra.mxu0 0.0
    %914 = vmatprep.subr.mxu0 0.0
    %915 = vmatpush1.msra.mxu0 0.0
    %916 = vmatprep.subr.mxu0 0.0
    %917 = vmatpush1.msra.mxu0 0.0
    %918 = vmatprep.subr.mxu0 0.0
    %919 = vmatpush1.msra.mxu0 0.0
    %920 = vmatprep.subr.mxu0 0.0
    %921 = vmatpush1.msra.mxu0 0.0
    %922 = vmatprep.subr.mxu0 0.0
    %923 = vmatpush1.msra.mxu0 0.0
    %924 = vmatprep.subr.mxu0 0.0
    %925 = vmatpush1.msra.mxu0 0.0
    %926 = vmatprep.mubr.f32.mxu0 0.0
    %927 = vmatmul.mubr.f32.gmra.mrb[0].mxu0 %v860
    %v928 = vpop.f32.mrb[0].mxu0
    %v929 = vadd.f32 0.0, %v928
    %v930 = vpop.f32.mrb[0].mxu0
    %v931 = vadd.f32 0.0, %v930
    %932 = vdwg.mxu0
    %933 = vmatprep.subr.mxu0 %v853
    %934 = vmatpush1.msra.mxu0 %v852
    %935 = vmatprep.subr.mxu0 %v857
    %936 = vmatpush1.msra.mxu0 %v856
    %937 = vmatprep.subr.mxu0 0.0
    %938 = vmatpush1.msra.mxu0 0.0
    %939 = vmatprep.subr.mxu0 0.0
    %940 = vmatpush1.msra.mxu0 0.0
    %941 = vmatprep.subr.mxu0 0.0
    %942 = vmatpush1.msra.mxu0 0.0
    %943 = vmatprep.subr.mxu0 0.0
    %944 = vmatpush1.msra.mxu0 0.0
    %945 = vmatprep.subr.mxu0 0.0
    %946 = vmatpush1.msra.mxu0 0.0
    %947 = vmatprep.subr.mxu0 0.0
    %948 = vmatpush1.msra.mxu0 0.0
    %949 = vmatprep.subr.mxu0 0.0
    %950 = vmatpush1.msra.mxu0 0.0
    %951 = vmatprep.subr.mxu0 0.0
    %952 = vmatpush1.msra.mxu0 0.0
    %953 = vmatprep.subr.mxu0 0.0
    %954 = vmatpush1.msra.mxu0 0.0
    %955 = vmatprep.subr.mxu0 0.0
    %956 = vmatpush1.msra.mxu0 0.0
    %957 = vmatprep.subr.mxu0 0.0
    %958 = vmatpush1.msra.mxu0 0.0
    %959 = vmatprep.subr.mxu0 0.0
    %960 = vmatpush1.msra.mxu0 0.0
    %961 = vmatprep.subr.mxu0 0.0
    %962 = vmatpush1.msra.mxu0 0.0
    %963 = vmatprep.subr.mxu0 0.0
    %964 = vmatpush1.msra.mxu0 0.0
    %965 = vmatprep.subr.mxu0 0.0
    %966 = vmatpush1.msra.mxu0 0.0
    %967 = vmatprep.subr.mxu0 0.0
    %968 = vmatpush1.msra.mxu0 0.0
    %969 = vmatprep.subr.mxu0 0.0
    %970 = vmatpush1.msra.mxu0 0.0
    %971 = vmatprep.subr.mxu0 0.0
    %972 = vmatpush1.msra.mxu0 0.0
    %973 = vmatprep.subr.mxu0 0.0
    %974 = vmatpush1.msra.mxu0 0.0
    %975 = vmatprep.subr.mxu0 0.0
    %976 = vmatpush1.msra.mxu0 0.0
    %977 = vmatprep.subr.mxu0 0.0
    %978 = vmatpush1.msra.mxu0 0.0
    %979 = vmatprep.subr.mxu0 0.0
    %980 = vmatpush1.msra.mxu0 0.0
    %981 = vmatprep.subr.mxu0 0.0
    %982 = vmatpush1.msra.mxu0 0.0
    %983 = vmatprep.subr.mxu0 0.0
    %984 = vmatpush1.msra.mxu0 0.0
    %985 = vmatprep.subr.mxu0 0.0
    %986 = vmatpush1.msra.mxu0 0.0
    %987 = vmatprep.subr.mxu0 0.0
    %988 = vmatpush1.msra.mxu0 0.0
    %989 = vmatprep.subr.mxu0 0.0
    %990 = vmatpush1.msra.mxu0 0.0
    %991 = vmatprep.subr.mxu0 0.0
    %992 = vmatpush1.msra.mxu0 0.0
    %993 = vmatprep.subr.mxu0 0.0
    %994 = vmatpush1.msra.mxu0 0.0
    %995 = vmatprep.subr.mxu0 0.0
    %996 = vmatpush1.msra.mxu0 0.0
    %997 = vmatprep.mubr.f32.mxu0 0.0
    %998 = vmatmul.mubr.f32.gmra.mrb[0].mxu0 %v860
    %v999 = vpop.f32.mrb[0].mxu0
    %v1000 = vadd.f32 0.0, %v999
    %v1001 = vpop.f32.mrb[0].mxu0
    %v1002 = vadd.f32 0.0, %v1001
    %1003 = vdwg.mxu0
    %1004 = vmatprep.subr.mxu0 %v334
    %1005 = vmatpush1.msra.mxu0 %v333
    %1006 = vmatprep.subr.mxu0 %v338
    %1007 = vmatpush1.msra.mxu0 %v337
    %1008 = vmatprep.subr.mxu0 %v342
    %1009 = vmatpush1.msra.mxu0 %v341
    %1010 = vmatprep.subr.mxu0 %v346
    %1011 = vmatpush1.msra.mxu0 %v345
    %1012 = vmatprep.subr.mxu0 %v350
    %1013 = vmatpush1.msra.mxu0 %v349
    %1014 = vmatprep.subr.mxu0 %v354
    %1015 = vmatpush1.msra.mxu0 %v353
    %1016 = vmatprep.subr.mxu0 %v358
    %1017 = vmatpush1.msra.mxu0 %v357
    %1018 = vmatprep.subr.mxu0 %v362
    %1019 = vmatpush1.msra.mxu0 %v361
    %1020 = vmatprep.subr.mxu0 %v366
    %1021 = vmatpush1.msra.mxu0 %v365
    %1022 = vmatprep.subr.mxu0 %v370
    %1023 = vmatpush1.msra.mxu0 %v369
    %1024 = vmatprep.subr.mxu0 %v374
    %1025 = vmatpush1.msra.mxu0 %v373
    %1026 = vmatprep.subr.mxu0 %v378
    %1027 = vmatpush1.msra.mxu0 %v377
    %1028 = vmatprep.subr.mxu0 %v382
    %1029 = vmatpush1.msra.mxu0 %v381
    %1030 = vmatprep.subr.mxu0 %v386
    %1031 = vmatpush1.msra.mxu0 %v385
    %1032 = vmatprep.subr.mxu0 %v390
    %1033 = vmatpush1.msra.mxu0 %v389
    %1034 = vmatprep.subr.mxu0 %v394
    %1035 = vmatpush1.msra.mxu0 %v393
    %1036 = vmatprep.subr.mxu0 %v398
    %1037 = vmatpush1.msra.mxu0 %v397
    %1038 = vmatprep.subr.mxu0 %v402
    %1039 = vmatpush1.msra.mxu0 %v401
    %1040 = vmatprep.subr.mxu0 %v406
    %1041 = vmatpush1.msra.mxu0 %v405
    %1042 = vmatprep.subr.mxu0 %v410
    %1043 = vmatpush1.msra.mxu0 %v409
    %1044 = vmatprep.subr.mxu0 %v414
    %1045 = vmatpush1.msra.mxu0 %v413
    %1046 = vmatprep.subr.mxu0 %v418
    %1047 = vmatpush1.msra.mxu0 %v417
    %1048 = vmatprep.subr.mxu0 %v422
    %1049 = vmatpush1.msra.mxu0 %v421
    %1050 = vmatprep.subr.mxu0 %v426
    %1051 = vmatpush1.msra.mxu0 %v425
    %1052 = vmatprep.subr.mxu0 %v430
    %1053 = vmatpush1.msra.mxu0 %v429
    %1054 = vmatprep.subr.mxu0 %v434
    %1055 = vmatpush1.msra.mxu0 %v433
    %1056 = vmatprep.subr.mxu0 %v438
    %1057 = vmatpush1.msra.mxu0 %v437
    %1058 = vmatprep.subr.mxu0 %v442
    %1059 = vmatpush1.msra.mxu0 %v441
    %1060 = vmatprep.subr.mxu0 %v446
    %1061 = vmatpush1.msra.mxu0 %v445
    %1062 = vmatprep.subr.mxu0 %v450
    %1063 = vmatpush1.msra.mxu0 %v449
    %1064 = vmatprep.subr.mxu0 %v454
    %1065 = vmatpush1.msra.mxu0 %v453
    %1066 = vmatprep.subr.mxu0 %v458
    %1067 = vmatpush1.msra.mxu0 %v457
    %1068 = vmatprep.mubr.f32.mxu0 %v70
    %1069 = vmatmul.mubr.f32.gmra.mrb[0].mxu0 %v69
    %v1070 = vpop.f32.mrb[0].mxu0
    %v1071 = vadd.f32 %v929, %v1070
    %v1072 = vpop.f32.mrb[0].mxu0
    %v1073 = vadd.f32 %v931, %v1072
    %1074 = vdwg.mxu0
    %1075 = vmatprep.subr.mxu0 %v462
    %1076 = vmatpush1.msra.mxu0 %v461
    %1077 = vmatprep.subr.mxu0 %v466
    %1078 = vmatpush1.msra.mxu0 %v465
    %1079 = vmatprep.subr.mxu0 %v470
    %1080 = vmatpush1.msra.mxu0 %v469
    %1081 = vmatprep.subr.mxu0 %v474
    %1082 = vmatpush1.msra.mxu0 %v473
    %1083 = vmatprep.subr.mxu0 %v478
    %1084 = vmatpush1.msra.mxu0 %v477
    %1085 = vmatprep.subr.mxu0 %v482
    %1086 = vmatpush1.msra.mxu0 %v481
    %1087 = vmatprep.subr.mxu0 %v486
    %1088 = vmatpush1.msra.mxu0 %v485
    %1089 = vmatprep.subr.mxu0 %v490
    %1090 = vmatpush1.msra.mxu0 %v489
    %1091 = vmatprep.subr.mxu0 %v494
    %1092 = vmatpush1.msra.mxu0 %v493
    %1093 = vmatprep.subr.mxu0 %v498
    %1094 = vmatpush1.msra.mxu0 %v497
    %1095 = vmatprep.subr.mxu0 %v502
    %1096 = vmatpush1.msra.mxu0 %v501
    %1097 = vmatprep.subr.mxu0 %v506
    %1098 = vmatpush1.msra.mxu0 %v505
    %1099 = vmatprep.subr.mxu0 %v510
    %1100 = vmatpush1.msra.mxu0 %v509
    %1101 = vmatprep.subr.mxu0 %v514
    %1102 = vmatpush1.msra.mxu0 %v513
    %1103 = vmatprep.subr.mxu0 %v518
    %1104 = vmatpush1.msra.mxu0 %v517
    %1105 = vmatprep.subr.mxu0 %v522
    %1106 = vmatpush1.msra.mxu0 %v521
    %1107 = vmatprep.subr.mxu0 %v526
    %1108 = vmatpush1.msra.mxu0 %v525
    %1109 = vmatprep.subr.mxu0 %v530
    %1110 = vmatpush1.msra.mxu0 %v529
    %1111 = vmatprep.subr.mxu0 %v534
    %1112 = vmatpush1.msra.mxu0 %v533
    %1113 = vmatprep.subr.mxu0 %v538
    %1114 = vmatpush1.msra.mxu0 %v537
    %1115 = vmatprep.subr.mxu0 %v542
    %1116 = vmatpush1.msra.mxu0 %v541
    %1117 = vmatprep.subr.mxu0 %v546
    %1118 = vmatpush1.msra.mxu0 %v545
    %1119 = vmatprep.subr.mxu0 %v550
    %1120 = vmatpush1.msra.mxu0 %v549
    %1121 = vmatprep.subr.mxu0 %v554
    %1122 = vmatpush1.msra.mxu0 %v553
    %1123 = vmatprep.subr.mxu0 %v558
    %1124 = vmatpush1.msra.mxu0 %v557
    %1125 = vmatprep.subr.mxu0 %v562
    %1126 = vmatpush1.msra.mxu0 %v561
    %1127 = vmatprep.subr.mxu0 %v566
    %1128 = vmatpush1.msra.mxu0 %v565
    %1129 = vmatprep.subr.mxu0 %v570
    %1130 = vmatpush1.msra.mxu0 %v569
    %1131 = vmatprep.subr.mxu0 %v574
    %1132 = vmatpush1.msra.mxu0 %v573
    %1133 = vmatprep.subr.mxu0 %v578
    %1134 = vmatpush1.msra.mxu0 %v577
    %1135 = vmatprep.subr.mxu0 %v582
    %1136 = vmatpush1.msra.mxu0 %v581
    %1137 = vmatprep.subr.mxu0 %v586
    %1138 = vmatpush1.msra.mxu0 %v585
    %1139 = vmatprep.mubr.f32.mxu0 %v72
    %1140 = vmatmul.mubr.f32.gmra.mrb[0].mxu0 %v71
    %v1141 = vpop.f32.mrb[0].mxu0
    %v1142 = vadd.f32 %v1071, %v1141
    %v1143 = vpop.f32.mrb[0].mxu0
    %v1144 = vadd.f32 %v1073, %v1143
    %1145 = vdwg.mxu0
    %1146 = vmatprep.subr.mxu0 %v590
    %1147 = vmatpush1.msra.mxu0 %v589
    %1148 = vmatprep.subr.mxu0 %v594
    %1149 = vmatpush1.msra.mxu0 %v593
    %1150 = vmatprep.subr.mxu0 %v598
    %1151 = vmatpush1.msra.mxu0 %v597
    %1152 = vmatprep.subr.mxu0 %v602
    %1153 = vmatpush1.msra.mxu0 %v601
    %1154 = vmatprep.subr.mxu0 %v606
    %1155 = vmatpush1.msra.mxu0 %v605
    %1156 = vmatprep.subr.mxu0 %v610
    %1157 = vmatpush1.msra.mxu0 %v609
    %1158 = vmatprep.subr.mxu0 %v614
    %1159 = vmatpush1.msra.mxu0 %v613
    %1160 = vmatprep.subr.mxu0 %v618
    %1161 = vmatpush1.msra.mxu0 %v617
    %1162 = vmatprep.subr.mxu0 %v622
    %1163 = vmatpush1.msra.mxu0 %v621
    %1164 = vmatprep.subr.mxu0 %v626
    %1165 = vmatpush1.msra.mxu0 %v625
    %1166 = vmatprep.subr.mxu0 %v630
    %1167 = vmatpush1.msra.mxu0 %v629
    %1168 = vmatprep.subr.mxu0 %v634
    %1169 = vmatpush1.msra.mxu0 %v633
    %1170 = vmatprep.subr.mxu0 %v638
    %1171 = vmatpush1.msra.mxu0 %v637
    %1172 = vmatprep.subr.mxu0 %v642
    %1173 = vmatpush1.msra.mxu0 %v641
    %1174 = vmatprep.subr.mxu0 %v646
    %1175 = vmatpush1.msra.mxu0 %v645
    %1176 = vmatprep.subr.mxu0 %v650
    %1177 = vmatpush1.msra.mxu0 %v649
    %1178 = vmatprep.subr.mxu0 %v654
    %1179 = vmatpush1.msra.mxu0 %v653
    %1180 = vmatprep.subr.mxu0 %v658
    %1181 = vmatpush1.msra.mxu0 %v657
    %1182 = vmatprep.subr.mxu0 %v662
    %1183 = vmatpush1.msra.mxu0 %v661
    %1184 = vmatprep.subr.mxu0 %v666
    %1185 = vmatpush1.msra.mxu0 %v665
    %1186 = vmatprep.subr.mxu0 %v670
    %1187 = vmatpush1.msra.mxu0 %v669
    %1188 = vmatprep.subr.mxu0 %v674
    %1189 = vmatpush1.msra.mxu0 %v673
    %1190 = vmatprep.subr.mxu0 %v678
    %1191 = vmatpush1.msra.mxu0 %v677
    %1192 = vmatprep.subr.mxu0 %v682
    %1193 = vmatpush1.msra.mxu0 %v681
    %1194 = vmatprep.subr.mxu0 %v686
    %1195 = vmatpush1.msra.mxu0 %v685
    %1196 = vmatprep.subr.mxu0 %v690
    %1197 = vmatpush1.msra.mxu0 %v689
    %1198 = vmatprep.subr.mxu0 %v694
    %1199 = vmatpush1.msra.mxu0 %v693
    %1200 = vmatprep.subr.mxu0 %v698
    %1201 = vmatpush1.msra.mxu0 %v697
    %1202 = vmatprep.subr.mxu0 %v702
    %1203 = vmatpush1.msra.mxu0 %v701
    %1204 = vmatprep.subr.mxu0 %v706
    %1205 = vmatpush1.msra.mxu0 %v705
    %1206 = vmatprep.subr.mxu0 %v710
    %1207 = vmatpush1.msra.mxu0 %v709
    %1208 = vmatprep.subr.mxu0 %v714
    %1209 = vmatpush1.msra.mxu0 %v713
    %1210 = vmatprep.mubr.f32.mxu0 %v74
    %1211 = vmatmul.mubr.f32.gmra.mrb[0].mxu0 %v73
    %v1212 = vpop.f32.mrb[0].mxu0
    %v1213 = vadd.f32 %v1142, %v1212
    %v1214 = vpop.f32.mrb[0].mxu0
    %v1215 = vadd.f32 %v1144, %v1214
    %1216 = vdwg.mxu0
    %1217 = vmatprep.subr.mxu0 %v718
    %1218 = vmatpush1.msra.mxu0 %v717
    %1219 = vmatprep.subr.mxu0 %v722
    %1220 = vmatpush1.msra.mxu0 %v721
    %1221 = vmatprep.subr.mxu0 %v726
    %1222 = vmatpush1.msra.mxu0 %v725
    %1223 = vmatprep.subr.mxu0 %v730
    %1224 = vmatpush1.msra.mxu0 %v729
    %1225 = vmatprep.subr.mxu0 %v734
    %1226 = vmatpush1.msra.mxu0 %v733
    %1227 = vmatprep.subr.mxu0 %v738
    %1228 = vmatpush1.msra.mxu0 %v737
    %1229 = vmatprep.subr.mxu0 %v742
    %1230 = vmatpush1.msra.mxu0 %v741
    %1231 = vmatprep.subr.mxu0 %v746
    %1232 = vmatpush1.msra.mxu0 %v745
    %1233 = vmatprep.subr.mxu0 %v750
    %1234 = vmatpush1.msra.mxu0 %v749
    %1235 = vmatprep.subr.mxu0 %v754
    %1236 = vmatpush1.msra.mxu0 %v753
    %1237 = vmatprep.subr.mxu0 %v758
    %1238 = vmatpush1.msra.mxu0 %v757
    %1239 = vmatprep.subr.mxu0 %v762
    %1240 = vmatpush1.msra.mxu0 %v761
    %1241 = vmatprep.subr.mxu0 %v766
    %1242 = vmatpush1.msra.mxu0 %v765
    %1243 = vmatprep.subr.mxu0 %v770
    %1244 = vmatpush1.msra.mxu0 %v769
    %1245 = vmatprep.subr.mxu0 %v774
    %1246 = vmatpush1.msra.mxu0 %v773
    %1247 = vmatprep.subr.mxu0 %v778
    %1248 = vmatpush1.msra.mxu0 %v777
    %1249 = vmatprep.subr.mxu0 %v782
    %1250 = vmatpush1.msra.mxu0 %v781
    %1251 = vmatprep.subr.mxu0 %v786
    %1252 = vmatpush1.msra.mxu0 %v785
    %1253 = vmatprep.subr.mxu0 %v790
    %1254 = vmatpush1.msra.mxu0 %v789
    %1255 = vmatprep.subr.mxu0 %v794
    %1256 = vmatpush1.msra.mxu0 %v793
    %1257 = vmatprep.subr.mxu0 %v798
    %1258 = vmatpush1.msra.mxu0 %v797
    %1259 = vmatprep.subr.mxu0 %v802
    %1260 = vmatpush1.msra.mxu0 %v801
    %1261 = vmatprep.subr.mxu0 %v806
    %1262 = vmatpush1.msra.mxu0 %v805
    %1263 = vmatprep.subr.mxu0 %v810
    %1264 = vmatpush1.msra.mxu0 %v809
    %1265 = vmatprep.subr.mxu0 %v814
    %1266 = vmatpush1.msra.mxu0 %v813
    %1267 = vmatprep.subr.mxu0 %v818
    %1268 = vmatpush1.msra.mxu0 %v817
    %1269 = vmatprep.subr.mxu0 %v822
    %1270 = vmatpush1.msra.mxu0 %v821
    %1271 = vmatprep.subr.mxu0 %v826
    %1272 = vmatpush1.msra.mxu0 %v825
    %1273 = vmatprep.subr.mxu0 %v830
    %1274 = vmatpush1.msra.mxu0 %v829
    %1275 = vmatprep.subr.mxu0 %v834
    %1276 = vmatpush1.msra.mxu0 %v833
    %1277 = vmatprep.subr.mxu0 %v838
    %1278 = vmatpush1.msra.mxu0 %v837
    %1279 = vmatprep.subr.mxu0 %v842
    %1280 = vmatpush1.msra.mxu0 %v841
    %1281 = vmatprep.mubr.f32.mxu0 %v76
    %1282 = vmatmul.mubr.f32.gmra.mrb[0].mxu0 %v75
    %v1283 = vpop.f32.mrb[0].mxu0
    %v1284 = vadd.f32 %v1213, %v1283
    %v1285 = vpop.f32.mrb[0].mxu0
    %v1286 = vadd.f32 %v1215, %v1285
    %1287 = vdwg.mxu0
    %1288 = vmatprep.subr.mxu0 %v336
    %1289 = vmatpush1.msra.mxu0 %v335
    %1290 = vmatprep.subr.mxu0 %v340
    %1291 = vmatpush1.msra.mxu0 %v339
    %1292 = vmatprep.subr.mxu0 %v344
    %1293 = vmatpush1.msra.mxu0 %v343
    %1294 = vmatprep.subr.mxu0 %v348
    %1295 = vmatpush1.msra.mxu0 %v347
    %1296 = vmatprep.subr.mxu0 %v352
    %1297 = vmatpush1.msra.mxu0 %v351
    %1298 = vmatprep.subr.mxu0 %v356
    %1299 = vmatpush1.msra.mxu0 %v355
    %1300 = vmatprep.subr.mxu0 %v360
    %1301 = vmatpush1.msra.mxu0 %v359
    %1302 = vmatprep.subr.mxu0 %v364
    %1303 = vmatpush1.msra.mxu0 %v363
    %1304 = vmatprep.subr.mxu0 %v368
    %1305 = vmatpush1.msra.mxu0 %v367
    %1306 = vmatprep.subr.mxu0 %v372
    %1307 = vmatpush1.msra.mxu0 %v371
    %1308 = vmatprep.subr.mxu0 %v376
    %1309 = vmatpush1.msra.mxu0 %v375
    %1310 = vmatprep.subr.mxu0 %v380
    %1311 = vmatpush1.msra.mxu0 %v379
    %1312 = vmatprep.subr.mxu0 %v384
    %1313 = vmatpush1.msra.mxu0 %v383
    %1314 = vmatprep.subr.mxu0 %v388
    %1315 = vmatpush1.msra.mxu0 %v387
    %1316 = vmatprep.subr.mxu0 %v392
    %1317 = vmatpush1.msra.mxu0 %v391
    %1318 = vmatprep.subr.mxu0 %v396
    %1319 = vmatpush1.msra.mxu0 %v395
    %1320 = vmatprep.subr.mxu0 %v400
    %1321 = vmatpush1.msra.mxu0 %v399
    %1322 = vmatprep.subr.mxu0 %v404
    %1323 = vmatpush1.msra.mxu0 %v403
    %1324 = vmatprep.subr.mxu0 %v408
    %1325 = vmatpush1.msra.mxu0 %v407
    %1326 = vmatprep.subr.mxu0 %v412
    %1327 = vmatpush1.msra.mxu0 %v411
    %1328 = vmatprep.subr.mxu0 %v416
    %1329 = vmatpush1.msra.mxu0 %v415
    %1330 = vmatprep.subr.mxu0 %v420
    %1331 = vmatpush1.msra.mxu0 %v419
    %1332 = vmatprep.subr.mxu0 %v424
    %1333 = vmatpush1.msra.mxu0 %v423
    %1334 = vmatprep.subr.mxu0 %v428
    %1335 = vmatpush1.msra.mxu0 %v427
    %1336 = vmatprep.subr.mxu0 %v432
    %1337 = vmatpush1.msra.mxu0 %v431
    %1338 = vmatprep.subr.mxu0 %v436
    %1339 = vmatpush1.msra.mxu0 %v435
    %1340 = vmatprep.subr.mxu0 %v440
    %1341 = vmatpush1.msra.mxu0 %v439
    %1342 = vmatprep.subr.mxu0 %v444
    %1343 = vmatpush1.msra.mxu0 %v443
    %1344 = vmatprep.subr.mxu0 %v448
    %1345 = vmatpush1.msra.mxu0 %v447
    %1346 = vmatprep.subr.mxu0 %v452
    %1347 = vmatpush1.msra.mxu0 %v451
    %1348 = vmatprep.subr.mxu0 %v456
    %1349 = vmatpush1.msra.mxu0 %v455
    %1350 = vmatprep.subr.mxu0 %v460
    %1351 = vmatpush1.msra.mxu0 %v459
    %1352 = vmatprep.mubr.f32.mxu0 %v70
    %1353 = vmatmul.mubr.f32.gmra.mrb[0].mxu0 %v69
    %v1354 = vpop.f32.mrb[0].mxu0
    %v1355 = vadd.f32 %v1000, %v1354
    %v1356 = vpop.f32.mrb[0].mxu0
    %v1357 = vadd.f32 %v1002, %v1356
    %1358 = vdwg.mxu0
    %1359 = vmatprep.subr.mxu0 %v464
    %1360 = vmatpush1.msra.mxu0 %v463
    %1361 = vmatprep.subr.mxu0 %v468
    %1362 = vmatpush1.msra.mxu0 %v467
    %1363 = vmatprep.subr.mxu0 %v472
    %1364 = vmatpush1.msra.mxu0 %v471
    %1365 = vmatprep.subr.mxu0 %v476
    %1366 = vmatpush1.msra.mxu0 %v475
    %1367 = vmatprep.subr.mxu0 %v480
    %1368 = vmatpush1.msra.mxu0 %v479
    %1369 = vmatprep.subr.mxu0 %v484
    %1370 = vmatpush1.msra.mxu0 %v483
    %1371 = vmatprep.subr.mxu0 %v488
    %1372 = vmatpush1.msra.mxu0 %v487
    %1373 = vmatprep.subr.mxu0 %v492
    %1374 = vmatpush1.msra.mxu0 %v491
    %1375 = vmatprep.subr.mxu0 %v496
    %1376 = vmatpush1.msra.mxu0 %v495
    %1377 = vmatprep.subr.mxu0 %v500
    %1378 = vmatpush1.msra.mxu0 %v499
    %1379 = vmatprep.subr.mxu0 %v504
    %1380 = vmatpush1.msra.mxu0 %v503
    %1381 = vmatprep.subr.mxu0 %v508
    %1382 = vmatpush1.msra.mxu0 %v507
    %1383 = vmatprep.subr.mxu0 %v512
    %1384 = vmatpush1.msra.mxu0 %v511
    %1385 = vmatprep.subr.mxu0 %v516
    %1386 = vmatpush1.msra.mxu0 %v515
    %1387 = vmatprep.subr.mxu0 %v520
    %1388 = vmatpush1.msra.mxu0 %v519
    %1389 = vmatprep.subr.mxu0 %v524
    %1390 = vmatpush1.msra.mxu0 %v523
    %1391 = vmatprep.subr.mxu0 %v528
    %1392 = vmatpush1.msra.mxu0 %v527
    %1393 = vmatprep.subr.mxu0 %v532
    %1394 = vmatpush1.msra.mxu0 %v531
    %1395 = vmatprep.subr.mxu0 %v536
    %1396 = vmatpush1.msra.mxu0 %v535
    %1397 = vmatprep.subr.mxu0 %v540
    %1398 = vmatpush1.msra.mxu0 %v539
    %1399 = vmatprep.subr.mxu0 %v544
    %1400 = vmatpush1.msra.mxu0 %v543
    %1401 = vmatprep.subr.mxu0 %v548
    %1402 = vmatpush1.msra.mxu0 %v547
    %1403 = vmatprep.subr.mxu0 %v552
    %1404 = vmatpush1.msra.mxu0 %v551
    %1405 = vmatprep.subr.mxu0 %v556
    %1406 = vmatpush1.msra.mxu0 %v555
    %1407 = vmatprep.subr.mxu0 %v560
    %1408 = vmatpush1.msra.mxu0 %v559
    %1409 = vmatprep.subr.mxu0 %v564
    %1410 = vmatpush1.msra.mxu0 %v563
    %1411 = vmatprep.subr.mxu0 %v568
    %1412 = vmatpush1.msra.mxu0 %v567
    %1413 = vmatprep.subr.mxu0 %v572
    %1414 = vmatpush1.msra.mxu0 %v571
    %1415 = vmatprep.subr.mxu0 %v576
    %1416 = vmatpush1.msra.mxu0 %v575
    %1417 = vmatprep.subr.mxu0 %v580
    %1418 = vmatpush1.msra.mxu0 %v579
    %1419 = vmatprep.subr.mxu0 %v584
    %1420 = vmatpush1.msra.mxu0 %v583
    %1421 = vmatprep.subr.mxu0 %v588
    %1422 = vmatpush1.msra.mxu0 %v587
    %1423 = vmatprep.mubr.f32.mxu0 %v72
    %1424 = vmatmul.mubr.f32.gmra.mrb[0].mxu0 %v71
    %v1425 = vpop.f32.mrb[0].mxu0
    %v1426 = vadd.f32 %v1355, %v1425
    %v1427 = vpop.f32.mrb[0].mxu0
    %v1428 = vadd.f32 %v1357, %v1427
    %1429 = vdwg.mxu0
    %1430 = vmatprep.subr.mxu0 %v592
    %1431 = vmatpush1.msra.mxu0 %v591
    %1432 = vmatprep.subr.mxu0 %v596
    %1433 = vmatpush1.msra.mxu0 %v595
    %1434 = vmatprep.subr.mxu0 %v600
    %1435 = vmatpush1.msra.mxu0 %v599
    %1436 = vmatprep.subr.mxu0 %v604
    %1437 = vmatpush1.msra.mxu0 %v603
    %1438 = vmatprep.subr.mxu0 %v608
    %1439 = vmatpush1.msra.mxu0 %v607
    %1440 = vmatprep.subr.mxu0 %v612
    %1441 = vmatpush1.msra.mxu0 %v611
    %1442 = vmatprep.subr.mxu0 %v616
    %1443 = vmatpush1.msra.mxu0 %v615
    %1444 = vmatprep.subr.mxu0 %v620
    %1445 = vmatpush1.msra.mxu0 %v619
    %1446 = vmatprep.subr.mxu0 %v624
    %1447 = vmatpush1.msra.mxu0 %v623
    %1448 = vmatprep.subr.mxu0 %v628
    %1449 = vmatpush1.msra.mxu0 %v627
    %1450 = vmatprep.subr.mxu0 %v632
    %1451 = vmatpush1.msra.mxu0 %v631
    %1452 = vmatprep.subr.mxu0 %v636
    %1453 = vmatpush1.msra.mxu0 %v635
    %1454 = vmatprep.subr.mxu0 %v640
    %1455 = vmatpush1.msra.mxu0 %v639
    %1456 = vmatprep.subr.mxu0 %v644
    %1457 = vmatpush1.msra.mxu0 %v643
    %1458 = vmatprep.subr.mxu0 %v648
    %1459 = vmatpush1.msra.mxu0 %v647
    %1460 = vmatprep.subr.mxu0 %v652
    %1461 = vmatpush1.msra.mxu0 %v651
    %1462 = vmatprep.subr.mxu0 %v656
    %1463 = vmatpush1.msra.mxu0 %v655
    %1464 = vmatprep.subr.mxu0 %v660
    %1465 = vmatpush1.msra.mxu0 %v659
    %1466 = vmatprep.subr.mxu0 %v664
    %1467 = vmatpush1.msra.mxu0 %v663
    %1468 = vmatprep.subr.mxu0 %v668
    %1469 = vmatpush1.msra.mxu0 %v667
    %1470 = vmatprep.subr.mxu0 %v672
    %1471 = vmatpush1.msra.mxu0 %v671
    %1472 = vmatprep.subr.mxu0 %v676
    %1473 = vmatpush1.msra.mxu0 %v675
    %1474 = vmatprep.subr.mxu0 %v680
    %1475 = vmatpush1.msra.mxu0 %v679
    %1476 = vmatprep.subr.mxu0 %v684
    %1477 = vmatpush1.msra.mxu0 %v683
    %1478 = vmatprep.subr.mxu0 %v688
    %1479 = vmatpush1.msra.mxu0 %v687
    %1480 = vmatprep.subr.mxu0 %v692
    %1481 = vmatpush1.msra.mxu0 %v691
    %1482 = vmatprep.subr.mxu0 %v696
    %1483 = vmatpush1.msra.mxu0 %v695
    %1484 = vmatprep.subr.mxu0 %v700
    %1485 = vmatpush1.msra.mxu0 %v699
    %1486 = vmatprep.subr.mxu0 %v704
    %1487 = vmatpush1.msra.mxu0 %v703
    %1488 = vmatprep.subr.mxu0 %v708
    %1489 = vmatpush1.msra.mxu0 %v707
    %1490 = vmatprep.subr.mxu0 %v712
    %1491 = vmatpush1.msra.mxu0 %v711
    %1492 = vmatprep.subr.mxu0 %v716
    %1493 = vmatpush1.msra.mxu0 %v715
    %1494 = vmatprep.mubr.f32.mxu0 %v74
    %1495 = vmatmul.mubr.f32.gmra.mrb[0].mxu0 %v73
    %v1496 = vpop.f32.mrb[0].mxu0
    %v1497 = vadd.f32 %v1426, %v1496
    %v1498 = vpop.f32.mrb[0].mxu0
    %v1499 = vadd.f32 %v1428, %v1498
    %1500 = vdwg.mxu0
    %1501 = vmatprep.subr.mxu0 %v720
    %1502 = vmatpush1.msra.mxu0 %v719
    %1503 = vmatprep.subr.mxu0 %v724
    %1504 = vmatpush1.msra.mxu0 %v723
    %1505 = vmatprep.subr.mxu0 %v728
    %1506 = vmatpush1.msra.mxu0 %v727
    %1507 = vmatprep.subr.mxu0 %v732
    %1508 = vmatpush1.msra.mxu0 %v731
    %1509 = vmatprep.subr.mxu0 %v736
    %1510 = vmatpush1.msra.mxu0 %v735
    %1511 = vmatprep.subr.mxu0 %v740
    %1512 = vmatpush1.msra.mxu0 %v739
    %1513 = vmatprep.subr.mxu0 %v744
    %1514 = vmatpush1.msra.mxu0 %v743
    %1515 = vmatprep.subr.mxu0 %v748
    %1516 = vmatpush1.msra.mxu0 %v747
    %1517 = vmatprep.subr.mxu0 %v752
    %1518 = vmatpush1.msra.mxu0 %v751
    %1519 = vmatprep.subr.mxu0 %v756
    %1520 = vmatpush1.msra.mxu0 %v755
    %1521 = vmatprep.subr.mxu0 %v760
    %1522 = vmatpush1.msra.mxu0 %v759
    %1523 = vmatprep.subr.mxu0 %v764
    %1524 = vmatpush1.msra.mxu0 %v763
    %1525 = vmatprep.subr.mxu0 %v768
    %1526 = vmatpush1.msra.mxu0 %v767
    %1527 = vmatprep.subr.mxu0 %v772
    %1528 = vmatpush1.msra.mxu0 %v771
    %1529 = vmatprep.subr.mxu0 %v776
    %1530 = vmatpush1.msra.mxu0 %v775
    %1531 = vmatprep.subr.mxu0 %v780
    %1532 = vmatpush1.msra.mxu0 %v779
    %1533 = vmatprep.subr.mxu0 %v784
    %1534 = vmatpush1.msra.mxu0 %v783
    %1535 = vmatprep.subr.mxu0 %v788
    %1536 = vmatpush1.msra.mxu0 %v787
    %1537 = vmatprep.subr.mxu0 %v792
    %1538 = vmatpush1.msra.mxu0 %v791
    %1539 = vmatprep.subr.mxu0 %v796
    %1540 = vmatpush1.msra.mxu0 %v795
    %1541 = vmatprep.subr.mxu0 %v800
    %1542 = vmatpush1.msra.mxu0 %v799
    %1543 = vmatprep.subr.mxu0 %v804
    %1544 = vmatpush1.msra.mxu0 %v803
    %1545 = vmatprep.subr.mxu0 %v808
    %1546 = vmatpush1.msra.mxu0 %v807
    %1547 = vmatprep.subr.mxu0 %v812
    %1548 = vmatpush1.msra.mxu0 %v811
    %1549 = vmatprep.subr.mxu0 %v816
    %1550 = vmatpush1.msra.mxu0 %v815
    %1551 = vmatprep.subr.mxu0 %v820
    %1552 = vmatpush1.msra.mxu0 %v819
    %1553 = vmatprep.subr.mxu0 %v824
    %1554 = vmatpush1.msra.mxu0 %v823
    %1555 = vmatprep.subr.mxu0 %v828
    %1556 = vmatpush1.msra.mxu0 %v827
    %1557 = vmatprep.subr.mxu0 %v832
    %1558 = vmatpush1.msra.mxu0 %v831
    %1559 = vmatprep.subr.mxu0 %v836
    %1560 = vmatpush1.msra.mxu0 %v835
    %1561 = vmatprep.subr.mxu0 %v840
    %1562 = vmatpush1.msra.mxu0 %v839
    %1563 = vmatprep.subr.mxu0 %v844
    %1564 = vmatpush1.msra.mxu0 %v843
    %1565 = vmatprep.mubr.f32.mxu0 %v76
    %1566 = vmatmul.mubr.f32.gmra.mrb[0].mxu0 %v75
    %v1567 = vpop.f32.mrb[0].mxu0
    %v1568 = vadd.f32 %v1497, %v1567
    %v1569 = vpop.f32.mrb[0].mxu0
    %v1570 = vadd.f32 %v1499, %v1569
    %1571 = vdwg.mxu0
    %v1572 = vmax.f32 %v1284, 0.0
    %v1573 = vmax.f32 %v1286, 0.0
    %v1574 = vmax.f32 %v1568, 0.0
    %v1575 = vmax.f32 %v1570, 0.0
    %1576 = vst [vmem:[#allocation10] sm:$0xff] %v1572
    %1577 = vst [vmem:[#allocation10 + $0x8] sm:$0xff] %v1573
    %1578 = vst [vmem:[#allocation10 + $0x10] sm:$0xff] %v1574
    %1579 = vst [vmem:[#allocation10 + $0x18] sm:$0xff] %v1575
    // Predicated region
    $region34: #{tpu_custom_call.1} parent=1 // pred_check
      _
    $region35: #{tpu_custom_call.1} parent=1 // pred_check_branch
      %1581 = sbr.rel (0) target = $region37
    $region36: #{tpu_custom_call.1} parent=1 // pred_region
      %s1583 = ssub.s32 512, 512
      %1584 = vsyncadd [#allocation4], %s1583
      %s1586 = sshll.u32 [#allocation10], 4
      %s1587 = int_to_ptr.vmem [resolvable:$true] %s1586
      %1589 = dma.vmem_to_hbm [thread:$0]  %s1587, 512, %s4, [#allocation4]
    $region37: #{tpu_custom_call.1} parent=1 // pred_fallthru
      _
    // Predicated region
    $region38: #{tpu_custom_call.1} parent=1 // pred_check
      _
    $region39: #{tpu_custom_call.1} parent=1 // pred_check_branch
      %1591 = sbr.rel (0) target = $region41
    $region40: #{tpu_custom_call.1} parent=1 // pred_region
      %1592 = dma.done [#allocation4], 512
    $region41: #{tpu_custom_call.1} parent=1 // pred_fallthru
      _
    %1593 = vsyncpa [#allocation3], 1
    %1594 = vsyncpa [#allocation6], 1
    %1595 = vsyncpa [#allocation9], 1
    %1596 = vsyncpa [#allocation4], 1

</llo_original>
